<compile_context>
chip_gen: v7x
topology: tpu7x:2x2x1
jax: 0.10.0
libtpu: 0.0.40
codegen_flags: <defaults>
</compile_context>

<pallas_src>
import functools

import jax
import jax.numpy as jnp
from jax.experimental import pallas as pl
from jax.experimental.pallas import tpu as pltpu


def _vmem_specs(n):
    return [pl.BlockSpec(memory_space=pltpu.MemorySpace.VMEM) for _ in range(n)]


def _round_up(x, m):
    return ((x + m - 1) // m) * m


def _pad_to(x, shape, value=0.0):
    pads = [(0, t - s) for s, t in zip(x.shape, shape)]
    return jnp.pad(x.astype(jnp.float32), pads, constant_values=value)


# ----------------------------------------------------------------------------
# Fully fused forward kernel:
#   n_layers x (ChebConv_k + folded BN(eval)+bias + ReLU + residual)
#   -> mean readout (pre-scaled membership matmul)
#   -> MLPReadout (Linear->ReLU->Linear->ReLU->Linear)
# Everything stays in VMEM; a single HBM store of the (Bp, 128) result.
# ----------------------------------------------------------------------------
def chebnet_fused_kernel(a_ref, x_ref, rnorm_ref, w_ref, scale_ref, shift_ref,
                         member_ref, w1_ref, b1_ref, w2_ref, b2_ref, w3_ref, b3_ref,
                         o_ref, *, k, n_layers, residual, mm_dtype):
    f32 = jnp.float32
    a = a_ref[...].astype(mm_dtype)          # (Np, Np) = D^-1/2 A D^-1/2
    rnorm = rnorm_ref[...]                   # (Np, 1)  = 2 / lambda_max per node
    h = x_ref[...]                           # (Np, Dp) f32 node features

    for layer in range(n_layers):            # static loop: h stays in VMEM/vregs
        # ---- Chebyshev basis stack T_0..T_{k-1} applied to h ----------------
        tx0 = h
        if k > 1:
            hp = jnp.dot(a, tx0.astype(mm_dtype), preferred_element_type=f32)
            tx1 = -rnorm * hp + tx0 * (rnorm - 1.0)
            txs = [tx0, tx1]
            t_prev, t_cur = tx0, tx1
            for _ in range(2, k):
                hp = jnp.dot(a, t_cur.astype(mm_dtype), preferred_element_type=f32)
                t_next = -2.0 * rnorm * hp + t_cur * (2.0 * (rnorm - 1.0)) - t_prev
                txs.append(t_next)
                t_prev, t_cur = t_cur, t_next
            tx = jnp.concatenate(txs, axis=1)          # (Np, k*Dp), lane-aligned
        else:
            tx = tx0

        # ---- single stacked weight matmul: sum_i T_i @ W_i ------------------
        y = jnp.dot(tx.astype(mm_dtype), w_ref[layer].astype(mm_dtype),
                    preferred_element_type=f32)        # (Np, Dp)

        # ---- folded ChebConv bias + BatchNorm (eval) affine, ReLU, residual -
        y = y * scale_ref[layer] + shift_ref[layer]
        y = jnp.maximum(y, 0.0)
        if residual[layer]:
            y = h + y
        h = y

    # ---- 'mean' readout: membership matrix is pre-scaled by 1/num_nodes -----
    hg = jnp.dot(member_ref[...].astype(mm_dtype), h.astype(mm_dtype),
                 preferred_element_type=f32)           # (Bp, Dp)

    # ---- MLPReadout ----------------------------------------------------------
    y = jnp.dot(hg, w1_ref[...], preferred_element_type=f32) + b1_ref[...]
    y = jnp.maximum(y, 0.0)
    y = jnp.dot(y, w2_ref[...], preferred_element_type=f32) + b2_ref[...]
    y = jnp.maximum(y, 0.0)
    o_ref[...] = jnp.dot(y, w3_ref[...], preferred_element_type=f32) + b3_ref[...]


# ----------------------------------------------------------------------------
# Host-side wrapper: embedding gather, padding to TPU-friendly shapes, BN-fold,
# weight stacking, then one pallas_call.
# ----------------------------------------------------------------------------
def chebnet_forward(node_types, a_norm, rnorm, member, scale, params, *, k,
                    batch_norm=True, residual=True, matmul_dtype=jnp.float32):
    n = a_norm.shape[0]
    b = member.shape[0]
    layers = params["layers"]
    n_layers = len(layers)
    hidden_dim = params["emb"].shape[1]

    dims_out = [l["w"].shape[2] for l in layers]
    dp = _round_up(max([hidden_dim] + dims_out), 128)        # 128-lane feature pad
    np_ = _round_up(n, 8)                                     # sublane pad (pack more
    bp = _round_up(b, 8)                                      # graphs here for tput)

    # --- host-side glue: embedding lookup + padding ---------------------------
    h0 = params["emb"][node_types]                            # Embedding (glue)
    # in_feat_dropout: identity in eval mode
    x_p = _pad_to(h0, (np_, dp))
    a_p = _pad_to(a_norm, (np_, np_))
    rnorm_p = _pad_to(rnorm, (np_, 1), value=1.0)
    member_p = _pad_to(member * scale, (bp, np_))             # fold 1/num_nodes in

    # --- stack per-layer weights; fold bias + BatchNorm(eval) into (scale,shift)
    w_stack, scale_stack, shift_stack, res_flags = [], [], [], []
    for layer in layers:
        w = layer["w"]                                        # (k, din, dout)
        _, din, dout = w.shape
        w_p = jnp.zeros((k, dp, dp), jnp.float32).at[:, :din, :dout].set(w)
        w_stack.append(w_p.reshape(k * dp, dp))               # lane-dense (k*Dp, Dp)
        if batch_norm:
            gamma, beta, mean, var = layer["bn"]
            s = gamma * jax.lax.rsqrt(var + 1e-5)             # PyTorch BN eval eps
            sh = (layer["b"] - mean) * s + beta               # conv bias folded in
        else:
            s = jnp.ones_like(layer["b"])
            sh = layer["b"]
        scale_stack.append(_pad_to(s, (1, dp)))               # padded chans -> 0
        shift_stack.append(_pad_to(sh, (1, dp)))
        res_flags.append(bool(residual) and (din == dout))
    w_stack = jnp.stack(w_stack)                              # (L, k*Dp, Dp)
    scale_stack = jnp.stack(scale_stack)                      # (L, 1, Dp)
    shift_stack = jnp.stack(shift_stack)                      # (L, 1, Dp)

    # --- MLPReadout weights, padded lane-dense --------------------------------
    w1, b1, w2, b2, w3, b3 = params["mlp"]
    d1p = _round_up(w1.shape[1], 128)
    d2p = _round_up(w2.shape[1], 128)
    outp = 128                                                # lane-dense final store
    w1_p = _pad_to(w1, (dp, d1p));   b1_p = _pad_to(b1, (1, d1p))
    w2_p = _pad_to(w2, (d1p, d2p));  b2_p = _pad_to(b2, (1, d2p))
    w3_p = _pad_to(w3, (d2p, outp)); b3_p = _pad_to(b3, (1, outp))

    kernel = functools.partial(
        chebnet_fused_kernel, k=k, n_layers=n_layers,
        residual=tuple(res_flags), mm_dtype=matmul_dtype)

    out_p = pl.pallas_call(
        kernel,
        out_shape=jax.ShapeDtypeStruct((bp, outp), jnp.float32),
        in_specs=_vmem_specs(13),
        out_specs=pl.BlockSpec(memory_space=pltpu.MemorySpace.VMEM),
    )(a_p, x_p, rnorm_p, w_stack, scale_stack, shift_stack, member_p,
      w1_p, b1_p, w2_p, b2_p, w3_p, b3_p)

    return out_p[:b, :w3.shape[1]]                            # strip padding


# ----------------------------------------------------------------------------
# Deterministic parameter / input construction.
# ----------------------------------------------------------------------------
def _uniform(key, shape, scale):
    return jax.random.uniform(key, shape, jnp.float32, -scale, scale)


def build_params(key, num_atom_type, hidden_dim, out_dim, n_layers, k):
    keys = jax.random.split(key, 3 + 2 * n_layers + 6)
    ki = iter(keys)
    params = {"emb": jax.random.normal(next(ki), (num_atom_type, hidden_dim), jnp.float32)}

    layers = []
    dims = [hidden_dim] * (n_layers - 1) + [out_dim]
    din = hidden_dim
    for dout in dims:
        s = 1.0 / jnp.sqrt(din)
        layers.append({
            "w": _uniform(next(ki), (k, din, dout), s),
            "b": _uniform(next(ki), (1, dout), s),
            "bn": (jnp.ones((1, dout), jnp.float32),    # gamma
                   jnp.zeros((1, dout), jnp.float32),   # beta
                   jnp.zeros((1, dout), jnp.float32),   # running mean
                   jnp.ones((1, dout), jnp.float32)),   # running var
        })
        din = dout
    params["layers"] = layers

    d0, d1, d2 = out_dim, out_dim // 2, out_dim // 4
    params["mlp"] = (
        _uniform(next(ki), (d0, d1), 1.0 / jnp.sqrt(d0)),
        _uniform(next(ki), (1, d1), 1.0 / jnp.sqrt(d0)),
        _uniform(next(ki), (d1, d2), 1.0 / jnp.sqrt(d1)),
        _uniform(next(ki), (1, d2), 1.0 / jnp.sqrt(d1)),
        _uniform(next(ki), (d2, 1), 1.0 / jnp.sqrt(d2)),
        _uniform(next(ki), (1, 1), 1.0 / jnp.sqrt(d2)),
    )
    return params


def random_sym_adj(key, n, p=0.4):
    u = jax.random.uniform(key, (n, n))
    a = (u < p).astype(jnp.float32)
    a = jnp.triu(a, 1)
    return a + a.T


if __name__ == "__main__":
    # net_params (small, ZINC-like)
    num_atom_type = 28
    hidden_dim = 32
    out_dim = 32
    n_layers = 3
    k_cheb = 3
    batch_size = 2
    n1, n2 = 9, 7
    n_nodes = n1 + n2

    key = jax.random.PRNGKey(0)
    k_params, k_a1, k_a2, k_types = jax.random.split(key, 4)

    params = build_params(k_params, num_atom_type, hidden_dim, out_dim, n_layers, k_cheb)

    # Batched graph as block-diagonal dense adjacency.
    adj = jnp.zeros((n_nodes, n_nodes), jnp.float32)
    adj = adj.at[:n1, :n1].set(random_sym_adj(k_a1, n1))
    adj = adj.at[n1:, n1:].set(random_sym_adj(k_a2, n2))
    deg = jnp.clip(adj.sum(axis=1), 1.0, None)                # in_degrees, clamp(min=1)
    d_inv_sqrt = deg ** -0.5
    a_norm = d_inv_sqrt[:, None] * adj * d_inv_sqrt[None, :]  # D^-1/2 A D^-1/2

    # lambda_max = [2] * batch_size, broadcast per node -> re_norm = 2 / lambda_max
    lam_per_node = jnp.concatenate([jnp.full((n1,), 2.0), jnp.full((n2,), 2.0)])
    rnorm = (2.0 / lam_per_node)[:, None].astype(jnp.float32)  # (N, 1)

    # node atom types
    node_types = jax.random.randint(k_types, (n_nodes,), 0, num_atom_type)

    # 'mean' readout membership and per-graph 1/num_nodes scale
    member = jnp.zeros((batch_size, n_nodes), jnp.float32)
    member = member.at[0, :n1].set(1.0)
    member = member.at[1, n1:].set(1.0)
    scale = jnp.array([[1.0 / n1], [1.0 / n2]], jnp.float32)

    # matmul_dtype=jnp.bfloat16 is recommended on v6e/v7x once shapes are
    # MXU-sized; default f32 keeps exact eval-mode parity with PyTorch.
    fwd = jax.jit(functools.partial(chebnet_forward, k=k_cheb,
                                    matmul_dtype=jnp.float32))
    out = fwd(node_types, a_norm, rnorm, member, scale, params)
    out = jax.block_until_ready(out)
    assert out.shape == (batch_size, 1)
    print("KERNEL_OK")
</pallas_src>

<mosaic_0001>
module attributes {stable_mosaic.version = 11 : i64} {
  func.func @chebnet_fused_kernel(%arg0: memref<16x16xf32, #tpu.memory_space<vmem>>, %arg1: memref<16x128xf32, #tpu.memory_space<vmem>>, %arg2: memref<16x1xf32, #tpu.memory_space<vmem>>, %arg3: memref<3x384x128xf32, #tpu.memory_space<vmem>>, %arg4: memref<3x1x128xf32, #tpu.memory_space<vmem>>, %arg5: memref<3x1x128xf32, #tpu.memory_space<vmem>>, %arg6: memref<8x16xf32, #tpu.memory_space<vmem>>, %arg7: memref<128x128xf32, #tpu.memory_space<vmem>>, %arg8: memref<1x128xf32, #tpu.memory_space<vmem>>, %arg9: memref<128x128xf32, #tpu.memory_space<vmem>>, %arg10: memref<1x128xf32, #tpu.memory_space<vmem>>, %arg11: memref<128x128xf32, #tpu.memory_space<vmem>>, %arg12: memref<1x128xf32, #tpu.memory_space<vmem>>, %arg13: memref<8x128xf32, #tpu.memory_space<vmem>>) attributes {dimension_semantics = [], scalar_prefetch = 0 : i64, scratch_operands = 0 : i64, tpu.core_type = #tpu.core_type<tc>} {
    %c0 = arith.constant 0 : index
    %c0_0 = arith.constant 0 : index
    %0 = vector.load %arg0[%c0, %c0_0] : memref<16x16xf32, #tpu.memory_space<vmem>>, vector<16x16xf32>
    %c0_1 = arith.constant 0 : index
    %c0_2 = arith.constant 0 : index
    %1 = vector.load %arg2[%c0_1, %c0_2] : memref<16x1xf32, #tpu.memory_space<vmem>>, vector<16x1xf32>
    %c0_3 = arith.constant 0 : index
    %c0_4 = arith.constant 0 : index
    %2 = vector.load %arg1[%c0_3, %c0_4] : memref<16x128xf32, #tpu.memory_space<vmem>>, vector<16x128xf32>
    %cst = arith.constant dense<0.000000e+00> : vector<16x128xf32>
    %3 = tpu.matmul %0, %2, %cst {dimension_numbers = #tpu.dot_dimension_numbers<[1], [0], [0], [1], [0, 0, 1, 1], [], []>} : vector<16x16xf32>, vector<16x128xf32>, vector<16x128xf32> -> vector<16x128xf32>
    %cst_5 = arith.constant 0.000000e+00 : f32
    %4 = vector.broadcast %cst_5 : f32 to vector<16x1xf32>
    %5 = arith.subf %4, %1 : vector<16x1xf32>
    %6 = vector.broadcast %5 : vector<16x1xf32> to vector<16x128xf32>
    %7 = arith.mulf %6, %3 : vector<16x128xf32>
    %cst_6 = arith.constant 1.000000e+00 : f32
    %8 = vector.broadcast %cst_6 : f32 to vector<16x1xf32>
    %9 = arith.subf %1, %8 : vector<16x1xf32>
    %10 = vector.broadcast %9 : vector<16x1xf32> to vector<16x128xf32>
    %11 = arith.mulf %2, %10 : vector<16x128xf32>
    %12 = arith.addf %7, %11 : vector<16x128xf32>
    %cst_7 = arith.constant dense<0.000000e+00> : vector<16x128xf32>
    %13 = tpu.matmul %0, %12, %cst_7 {dimension_numbers = #tpu.dot_dimension_numbers<[1], [0], [0], [1], [0, 0, 1, 1], [], []>} : vector<16x16xf32>, vector<16x128xf32>, vector<16x128xf32> -> vector<16x128xf32>
    %cst_8 = arith.constant -2.000000e+00 : f32
    %14 = vector.broadcast %cst_8 : f32 to vector<16x1xf32>
    %15 = arith.mulf %14, %1 : vector<16x1xf32>
    %16 = vector.broadcast %15 : vector<16x1xf32> to vector<16x128xf32>
    %17 = arith.mulf %16, %13 : vector<16x128xf32>
    %cst_9 = arith.constant 1.000000e+00 : f32
    %18 = vector.broadcast %cst_9 : f32 to vector<16x1xf32>
    %19 = arith.subf %1, %18 : vector<16x1xf32>
    %cst_10 = arith.constant 2.000000e+00 : f32
    %20 = vector.broadcast %cst_10 : f32 to vector<16x1xf32>
    %21 = arith.mulf %20, %19 : vector<16x1xf32>
    %22 = vector.broadcast %21 : vector<16x1xf32> to vector<16x128xf32>
    %23 = arith.mulf %12, %22 : vector<16x128xf32>
    %24 = arith.addf %17, %23 : vector<16x128xf32>
    %25 = arith.subf %24, %2 : vector<16x128xf32>
    %26 = tpu.concatenate %2, %12, %25 in 1 : vector<16x128xf32>, vector<16x128xf32>, vector<16x128xf32> -> vector<16x384xf32>
    %c0_11 = arith.constant 0 : index
    %c0_12 = arith.constant 0 : index
    %c0_13 = arith.constant 0 : index
    %27 = vector.load %arg3[%c0_11, %c0_12, %c0_13] : memref<3x384x128xf32, #tpu.memory_space<vmem>>, vector<1x384x128xf32>
    %28 = vector.shape_cast %27 : vector<1x384x128xf32> to vector<384x128xf32>
    %cst_14 = arith.constant dense<0.000000e+00> : vector<16x128xf32>
    %29 = tpu.matmul %26, %28, %cst_14 {dimension_numbers = #tpu.dot_dimension_numbers<[1], [0], [0], [1], [0, 0, 1, 1], [], []>} : vector<16x384xf32>, vector<384x128xf32>, vector<16x128xf32> -> vector<16x128xf32>
    %c0_15 = arith.constant 0 : index
    %c0_16 = arith.constant 0 : index
    %c0_17 = arith.constant 0 : index
    %30 = vector.load %arg4[%c0_15, %c0_16, %c0_17] : memref<3x1x128xf32, #tpu.memory_space<vmem>>, vector<1x1x128xf32>
    %31 = vector.shape_cast %30 : vector<1x1x128xf32> to vector<1x128xf32>
    %32 = vector.broadcast %31 : vector<1x128xf32> to vector<16x128xf32>
    %33 = arith.mulf %29, %32 : vector<16x128xf32>
    %c0_18 = arith.constant 0 : index
    %c0_19 = arith.constant 0 : index
    %c0_20 = arith.constant 0 : index
    %34 = vector.load %arg5[%c0_18, %c0_19, %c0_20] : memref<3x1x128xf32, #tpu.memory_space<vmem>>, vector<1x1x128xf32>
    %35 = vector.shape_cast %34 : vector<1x1x128xf32> to vector<1x128xf32>
    %36 = vector.broadcast %35 : vector<1x128xf32> to vector<16x128xf32>
    %37 = arith.addf %33, %36 : vector<16x128xf32>
    %cst_21 = arith.constant 0.000000e+00 : f32
    %38 = vector.broadcast %cst_21 : f32 to vector<16x128xf32>
    %39 = arith.maximumf %37, %38 : vector<16x128xf32>
    %40 = arith.addf %2, %39 : vector<16x128xf32>
    %cst_22 = arith.constant dense<0.000000e+00> : vector<16x128xf32>
    %41 = tpu.matmul %0, %40, %cst_22 {dimension_numbers = #tpu.dot_dimension_numbers<[1], [0], [0], [1], [0, 0, 1, 1], [], []>} : vector<16x16xf32>, vector<16x128xf32>, vector<16x128xf32> -> vector<16x128xf32>
    %cst_23 = arith.constant 0.000000e+00 : f32
    %42 = vector.broadcast %cst_23 : f32 to vector<16x1xf32>
    %43 = arith.subf %42, %1 : vector<16x1xf32>
    %44 = vector.broadcast %43 : vector<16x1xf32> to vector<16x128xf32>
    %45 = arith.mulf %44, %41 : vector<16x128xf32>
    %cst_24 = arith.constant 1.000000e+00 : f32
    %46 = vector.broadcast %cst_24 : f32 to vector<16x1xf32>
    %47 = arith.subf %1, %46 : vector<16x1xf32>
    %48 = vector.broadcast %47 : vector<16x1xf32> to vector<16x128xf32>
    %49 = arith.mulf %40, %48 : vector<16x128xf32>
    %50 = arith.addf %45, %49 : vector<16x128xf32>
    %cst_25 = arith.constant dense<0.000000e+00> : vector<16x128xf32>
    %51 = tpu.matmul %0, %50, %cst_25 {dimension_numbers = #tpu.dot_dimension_numbers<[1], [0], [0], [1], [0, 0, 1, 1], [], []>} : vector<16x16xf32>, vector<16x128xf32>, vector<16x128xf32> -> vector<16x128xf32>
    %cst_26 = arith.constant -2.000000e+00 : f32
    %52 = vector.broadcast %cst_26 : f32 to vector<16x1xf32>
    %53 = arith.mulf %52, %1 : vector<16x1xf32>
    %54 = vector.broadcast %53 : vector<16x1xf32> to vector<16x128xf32>
    %55 = arith.mulf %54, %51 : vector<16x128xf32>
    %cst_27 = arith.constant 1.000000e+00 : f32
    %56 = vector.broadcast %cst_27 : f32 to vector<16x1xf32>
    %57 = arith.subf %1, %56 : vector<16x1xf32>
    %cst_28 = arith.constant 2.000000e+00 : f32
    %58 = vector.broadcast %cst_28 : f32 to vector<16x1xf32>
    %59 = arith.mulf %58, %57 : vector<16x1xf32>
    %60 = vector.broadcast %59 : vector<16x1xf32> to vector<16x128xf32>
    %61 = arith.mulf %50, %60 : vector<16x128xf32>
    %62 = arith.addf %55, %61 : vector<16x128xf32>
    %63 = arith.subf %62, %40 : vector<16x128xf32>
    %64 = tpu.concatenate %40, %50, %63 in 1 : vector<16x128xf32>, vector<16x128xf32>, vector<16x128xf32> -> vector<16x384xf32>
    %c1 = arith.constant 1 : index
    %c0_29 = arith.constant 0 : index
    %c0_30 = arith.constant 0 : index
    %65 = vector.load %arg3[%c1, %c0_29, %c0_30] : memref<3x384x128xf32, #tpu.memory_space<vmem>>, vector<1x384x128xf32>
    %66 = vector.shape_cast %65 : vector<1x384x128xf32> to vector<384x128xf32>
    %cst_31 = arith.constant dense<0.000000e+00> : vector<16x128xf32>
    %67 = tpu.matmul %64, %66, %cst_31 {dimension_numbers = #tpu.dot_dimension_numbers<[1], [0], [0], [1], [0, 0, 1, 1], [], []>} : vector<16x384xf32>, vector<384x128xf32>, vector<16x128xf32> -> vector<16x128xf32>
    %c1_32 = arith.constant 1 : index
    %c0_33 = arith.constant 0 : index
    %c0_34 = arith.constant 0 : index
    %68 = vector.load %arg4[%c1_32, %c0_33, %c0_34] : memref<3x1x128xf32, #tpu.memory_space<vmem>>, vector<1x1x128xf32>
    %69 = vector.shape_cast %68 : vector<1x1x128xf32> to vector<1x128xf32>
    %70 = vector.broadcast %69 : vector<1x128xf32> to vector<16x128xf32>
    %71 = arith.mulf %67, %70 : vector<16x128xf32>
    %c1_35 = arith.constant 1 : index
    %c0_36 = arith.constant 0 : index
    %c0_37 = arith.constant 0 : index
    %72 = vector.load %arg5[%c1_35, %c0_36, %c0_37] : memref<3x1x128xf32, #tpu.memory_space<vmem>>, vector<1x1x128xf32>
    %73 = vector.shape_cast %72 : vector<1x1x128xf32> to vector<1x128xf32>
    %74 = vector.broadcast %73 : vector<1x128xf32> to vector<16x128xf32>
    %75 = arith.addf %71, %74 : vector<16x128xf32>
    %cst_38 = arith.constant 0.000000e+00 : f32
    %76 = vector.broadcast %cst_38 : f32 to vector<16x128xf32>
    %77 = arith.maximumf %75, %76 : vector<16x128xf32>
    %78 = arith.addf %40, %77 : vector<16x128xf32>
    %cst_39 = arith.constant dense<0.000000e+00> : vector<16x128xf32>
    %79 = tpu.matmul %0, %78, %cst_39 {dimension_numbers = #tpu.dot_dimension_numbers<[1], [0], [0], [1], [0, 0, 1, 1], [], []>} : vector<16x16xf32>, vector<16x128xf32>, vector<16x128xf32> -> vector<16x128xf32>
    %cst_40 = arith.constant 0.000000e+00 : f32
    %80 = vector.broadcast %cst_40 : f32 to vector<16x1xf32>
    %81 = arith.subf %80, %1 : vector<16x1xf32>
    %82 = vector.broadcast %81 : vector<16x1xf32> to vector<16x128xf32>
    %83 = arith.mulf %82, %79 : vector<16x128xf32>
    %cst_41 = arith.constant 1.000000e+00 : f32
    %84 = vector.broadcast %cst_41 : f32 to vector<16x1xf32>
    %85 = arith.subf %1, %84 : vector<16x1xf32>
    %86 = vector.broadcast %85 : vector<16x1xf32> to vector<16x128xf32>
    %87 = arith.mulf %78, %86 : vector<16x128xf32>
    %88 = arith.addf %83, %87 : vector<16x128xf32>
    %cst_42 = arith.constant dense<0.000000e+00> : vector<16x128xf32>
    %89 = tpu.matmul %0, %88, %cst_42 {dimension_numbers = #tpu.dot_dimension_numbers<[1], [0], [0], [1], [0, 0, 1, 1], [], []>} : vector<16x16xf32>, vector<16x128xf32>, vector<16x128xf32> -> vector<16x128xf32>
    %cst_43 = arith.constant -2.000000e+00 : f32
    %90 = vector.broadcast %cst_43 : f32 to vector<16x1xf32>
    %91 = arith.mulf %90, %1 : vector<16x1xf32>
    %92 = vector.broadcast %91 : vector<16x1xf32> to vector<16x128xf32>
    %93 = arith.mulf %92, %89 : vector<16x128xf32>
    %cst_44 = arith.constant 1.000000e+00 : f32
    %94 = vector.broadcast %cst_44 : f32 to vector<16x1xf32>
    %95 = arith.subf %1, %94 : vector<16x1xf32>
    %cst_45 = arith.constant 2.000000e+00 : f32
    %96 = vector.broadcast %cst_45 : f32 to vector<16x1xf32>
    %97 = arith.mulf %96, %95 : vector<16x1xf32>
    %98 = vector.broadcast %97 : vector<16x1xf32> to vector<16x128xf32>
    %99 = arith.mulf %88, %98 : vector<16x128xf32>
    %100 = arith.addf %93, %99 : vector<16x128xf32>
    %101 = arith.subf %100, %78 : vector<16x128xf32>
    %102 = tpu.concatenate %78, %88, %101 in 1 : vector<16x128xf32>, vector<16x128xf32>, vector<16x128xf32> -> vector<16x384xf32>
    %c2 = arith.constant 2 : index
    %c0_46 = arith.constant 0 : index
    %c0_47 = arith.constant 0 : index
    %103 = vector.load %arg3[%c2, %c0_46, %c0_47] : memref<3x384x128xf32, #tpu.memory_space<vmem>>, vector<1x384x128xf32>
    %104 = vector.shape_cast %103 : vector<1x384x128xf32> to vector<384x128xf32>
    %cst_48 = arith.constant dense<0.000000e+00> : vector<16x128xf32>
    %105 = tpu.matmul %102, %104, %cst_48 {dimension_numbers = #tpu.dot_dimension_numbers<[1], [0], [0], [1], [0, 0, 1, 1], [], []>} : vector<16x384xf32>, vector<384x128xf32>, vector<16x128xf32> -> vector<16x128xf32>
    %c2_49 = arith.constant 2 : index
    %c0_50 = arith.constant 0 : index
    %c0_51 = arith.constant 0 : index
    %106 = vector.load %arg4[%c2_49, %c0_50, %c0_51] : memref<3x1x128xf32, #tpu.memory_space<vmem>>, vector<1x1x128xf32>
    %107 = vector.shape_cast %106 : vector<1x1x128xf32> to vector<1x128xf32>
    %108 = vector.broadcast %107 : vector<1x128xf32> to vector<16x128xf32>
    %109 = arith.mulf %105, %108 : vector<16x128xf32>
    %c2_52 = arith.constant 2 : index
    %c0_53 = arith.constant 0 : index
    %c0_54 = arith.constant 0 : index
    %110 = vector.load %arg5[%c2_52, %c0_53, %c0_54] : memref<3x1x128xf32, #tpu.memory_space<vmem>>, vector<1x1x128xf32>
    %111 = vector.shape_cast %110 : vector<1x1x128xf32> to vector<1x128xf32>
    %112 = vector.broadcast %111 : vector<1x128xf32> to vector<16x128xf32>
    %113 = arith.addf %109, %112 : vector<16x128xf32>
    %cst_55 = arith.constant 0.000000e+00 : f32
    %114 = vector.broadcast %cst_55 : f32 to vector<16x128xf32>
    %115 = arith.maximumf %113, %114 : vector<16x128xf32>
    %116 = arith.addf %78, %115 : vector<16x128xf32>
    %c0_56 = arith.constant 0 : index
    %c0_57 = arith.constant 0 : index
    %117 = vector.load %arg6[%c0_56, %c0_57] : memref<8x16xf32, #tpu.memory_space<vmem>>, vector<8x16xf32>
    %cst_58 = arith.constant dense<0.000000e+00> : vector<8x128xf32>
    %118 = tpu.matmul %117, %116, %cst_58 {dimension_numbers = #tpu.dot_dimension_numbers<[1], [0], [0], [1], [0, 0, 1, 1], [], []>} : vector<8x16xf32>, vector<16x128xf32>, vector<8x128xf32> -> vector<8x128xf32>
    %c0_59 = arith.constant 0 : index
    %c0_60 = arith.constant 0 : index
    %119 = vector.load %arg7[%c0_59, %c0_60] : memref<128x128xf32, #tpu.memory_space<vmem>>, vector<128x128xf32>
    %cst_61 = arith.constant dense<0.000000e+00> : vector<8x128xf32>
    %120 = tpu.matmul %118, %119, %cst_61 {dimension_numbers = #tpu.dot_dimension_numbers<[1], [0], [0], [1], [0, 0, 1, 1], [], []>} : vector<8x128xf32>, vector<128x128xf32>, vector<8x128xf32> -> vector<8x128xf32>
    %c0_62 = arith.constant 0 : index
    %c0_63 = arith.constant 0 : index
    %121 = vector.load %arg8[%c0_62, %c0_63] : memref<1x128xf32, #tpu.memory_space<vmem>>, vector<1x128xf32>
    %122 = vector.broadcast %121 : vector<1x128xf32> to vector<8x128xf32>
    %123 = arith.addf %120, %122 : vector<8x128xf32>
    %cst_64 = arith.constant 0.000000e+00 : f32
    %124 = vector.broadcast %cst_64 : f32 to vector<8x128xf32>
    %125 = arith.maximumf %123, %124 : vector<8x128xf32>
    %c0_65 = arith.constant 0 : index
    %c0_66 = arith.constant 0 : index
    %126 = vector.load %arg9[%c0_65, %c0_66] : memref<128x128xf32, #tpu.memory_space<vmem>>, vector<128x128xf32>
    %cst_67 = arith.constant dense<0.000000e+00> : vector<8x128xf32>
    %127 = tpu.matmul %125, %126, %cst_67 {dimension_numbers = #tpu.dot_dimension_numbers<[1], [0], [0], [1], [0, 0, 1, 1], [], []>} : vector<8x128xf32>, vector<128x128xf32>, vector<8x128xf32> -> vector<8x128xf32>
    %c0_68 = arith.constant 0 : index
    %c0_69 = arith.constant 0 : index
    %128 = vector.load %arg10[%c0_68, %c0_69] : memref<1x128xf32, #tpu.memory_space<vmem>>, vector<1x128xf32>
    %129 = vector.broadcast %128 : vector<1x128xf32> to vector<8x128xf32>
    %130 = arith.addf %127, %129 : vector<8x128xf32>
    %cst_70 = arith.constant 0.000000e+00 : f32
    %131 = vector.broadcast %cst_70 : f32 to vector<8x128xf32>
    %132 = arith.maximumf %130, %131 : vector<8x128xf32>
    %c0_71 = arith.constant 0 : index
    %c0_72 = arith.constant 0 : index
    %133 = vector.load %arg11[%c0_71, %c0_72] : memref<128x128xf32, #tpu.memory_space<vmem>>, vector<128x128xf32>
    %cst_73 = arith.constant dense<0.000000e+00> : vector<8x128xf32>
    %134 = tpu.matmul %132, %133, %cst_73 {dimension_numbers = #tpu.dot_dimension_numbers<[1], [0], [0], [1], [0, 0, 1, 1], [], []>} : vector<8x128xf32>, vector<128x128xf32>, vector<8x128xf32> -> vector<8x128xf32>
    %c0_74 = arith.constant 0 : index
    %c0_75 = arith.constant 0 : index
    %135 = vector.load %arg12[%c0_74, %c0_75] : memref<1x128xf32, #tpu.memory_space<vmem>>, vector<1x128xf32>
    %136 = vector.broadcast %135 : vector<1x128xf32> to vector<8x128xf32>
    %137 = arith.addf %134, %136 : vector<8x128xf32>
    %c0_76 = arith.constant 0 : index
    %c0_77 = arith.constant 0 : index
    %138 = vector.load %arg13[%c0_76, %c0_77] : memref<8x128xf32, #tpu.memory_space<vmem>>, vector<8x128xf32>
    tpu.vector_store %arg13[%c0_76, %c0_77], %137 {strides = array<i32>} : memref<8x128xf32, #tpu.memory_space<vmem>>, vector<8x128xf32>,
    return
  }
}

</mosaic_0001>

<llo_original>
// kernel: chebnet_forward.1
$region0: #{chebnet_forward.1}
  #allocation0 [shape = 'u32[]', space=smem, size = 0x4, offset = 0x4, fixed_abs, tag = 'smem constant byte address 0x4 - core index']
  #allocation1 [shape = 'u32[144,128]{1,0:T(1,128)}', space=vmem, size = 0x12000, scoped, tag = 'internal scratch']
  %s0 = inlined_call_operand.vmem [shape: f32[16,16], index: 0, kind: input, shape index: {}]
  %s1 = inlined_call_operand.vmem [shape: f32[16,128], index: 1, kind: input, shape index: {}]
  %s2 = inlined_call_operand.vmem [shape: f32[16,1], index: 2, kind: input, shape index: {}]
  %s3 = inlined_call_operand.vmem [shape: f32[3,384,128], index: 3, kind: input, shape index: {}]
  %s4 = inlined_call_operand.vmem [shape: f32[3,1,128], index: 4, kind: input, shape index: {}]
  %s5 = inlined_call_operand.vmem [shape: f32[3,1,128], index: 5, kind: input, shape index: {}]
  %s6 = inlined_call_operand.vmem [shape: f32[8,16], index: 6, kind: input, shape index: {}]
  %s7 = inlined_call_operand.vmem [shape: f32[128,128], index: 7, kind: input, shape index: {}]
  %s8 = inlined_call_operand.vmem [shape: f32[1,128], index: 8, kind: input, shape index: {}]
  %s9 = inlined_call_operand.vmem [shape: f32[128,128], index: 9, kind: input, shape index: {}]
  %s10 = inlined_call_operand.vmem [shape: f32[1,128], index: 10, kind: input, shape index: {}]
  %s11 = inlined_call_operand.vmem [shape: f32[128,128], index: 11, kind: input, shape index: {}]
  %s12 = inlined_call_operand.vmem [shape: f32[1,128], index: 12, kind: input, shape index: {}]
  %s13 = inlined_call_operand.vmem [shape: f32[8,128], index: 13, kind: output, shape index: {}]
  %s14 = sld [smem:[#allocation0]]
  $region62: #{chebnet_forward.1} parent=0
    _
  %s16 = ssub.s32 1, %s14
  %s17 = scalar_select 0, %s16, %s14
  // Predicated region
  $region2: #{chebnet_forward.1} parent=0 // pred_check
    _
  $region3: #{chebnet_forward.1} parent=0 // pred_check_branch
    %19 = sbr.rel (0) target = $region5
  $region4: #{chebnet_forward.1} parent=0 // pred_region
    _
  $region5: #{chebnet_forward.1} parent=0 // pred_fallthru
    _
  // Predicated region
  $region6: #{chebnet_forward.1} parent=0 // pred_check
    _
  $region7: #{chebnet_forward.1} parent=0 // pred_check_branch
    %21 = sbr.rel (0) target = $region9
  $region8: #{chebnet_forward.1} parent=0 // pred_region
    _
  $region9: #{chebnet_forward.1} parent=0 // pred_fallthru
    _
  // Predicated region
  $region10: #{chebnet_forward.1} parent=0 // pred_check
    _
  $region11: #{chebnet_forward.1} parent=0 // pred_check_branch
    %23 = sbr.rel (0) target = $region13
  $region12: #{chebnet_forward.1} parent=0 // pred_region
    _
  $region13: #{chebnet_forward.1} parent=0 // pred_fallthru
    _
  // Predicated region
  $region14: #{chebnet_forward.1} parent=0 // pred_check
    _
  $region15: #{chebnet_forward.1} parent=0 // pred_check_branch
    %25 = sbr.rel (0) target = $region17
  $region16: #{chebnet_forward.1} parent=0 // pred_region
    _
  $region17: #{chebnet_forward.1} parent=0 // pred_fallthru
    _
  // Predicated region
  $region18: #{chebnet_forward.1} parent=0 // pred_check
    _
  $region19: #{chebnet_forward.1} parent=0 // pred_check_branch
    %27 = sbr.rel (0) target = $region21
  $region20: #{chebnet_forward.1} parent=0 // pred_region
    _
  $region21: #{chebnet_forward.1} parent=0 // pred_fallthru
    _
  // Predicated region
  $region22: #{chebnet_forward.1} parent=0 // pred_check
    _
  $region23: #{chebnet_forward.1} parent=0 // pred_check_branch
    %29 = sbr.rel (0) target = $region25
  $region24: #{chebnet_forward.1} parent=0 // pred_region
    _
  $region25: #{chebnet_forward.1} parent=0 // pred_fallthru
    _
  // Predicated region
  $region26: #{chebnet_forward.1} parent=0 // pred_check
    _
  $region27: #{chebnet_forward.1} parent=0 // pred_check_branch
    %31 = sbr.rel (0) target = $region29
  $region28: #{chebnet_forward.1} parent=0 // pred_region
    _
  $region29: #{chebnet_forward.1} parent=0 // pred_fallthru
    _
  // Predicated region
  $region30: #{chebnet_forward.1} parent=0 // pred_check
    _
  $region31: #{chebnet_forward.1} parent=0 // pred_check_branch
    %33 = sbr.rel (0) target = $region33
  $region32: #{chebnet_forward.1} parent=0 // pred_region
    _
  $region33: #{chebnet_forward.1} parent=0 // pred_fallthru
    _
  // Predicated region
  $region34: #{chebnet_forward.1} parent=0 // pred_check
    _
  $region35: #{chebnet_forward.1} parent=0 // pred_check_branch
    %35 = sbr.rel (0) target = $region37
  $region36: #{chebnet_forward.1} parent=0 // pred_region
    _
  $region37: #{chebnet_forward.1} parent=0 // pred_fallthru
    _
  // Predicated region
  $region38: #{chebnet_forward.1} parent=0 // pred_check
    _
  $region39: #{chebnet_forward.1} parent=0 // pred_check_branch
    %37 = sbr.rel (0) target = $region41
  $region40: #{chebnet_forward.1} parent=0 // pred_region
    _
  $region41: #{chebnet_forward.1} parent=0 // pred_fallthru
    _
  // Predicated region
  $region42: #{chebnet_forward.1} parent=0 // pred_check
    _
  $region43: #{chebnet_forward.1} parent=0 // pred_check_branch
    %39 = sbr.rel (0) target = $region45
  $region44: #{chebnet_forward.1} parent=0 // pred_region
    _
  $region45: #{chebnet_forward.1} parent=0 // pred_fallthru
    _
  // Predicated region
  $region46: #{chebnet_forward.1} parent=0 // pred_check
    _
  $region47: #{chebnet_forward.1} parent=0 // pred_check_branch
    %41 = sbr.rel (0) target = $region49
  $region48: #{chebnet_forward.1} parent=0 // pred_region
    _
  $region49: #{chebnet_forward.1} parent=0 // pred_fallthru
    _
  // Predicated region
  $region50: #{chebnet_forward.1} parent=0 // pred_check
    _
  $region51: #{chebnet_forward.1} parent=0 // pred_check_branch
    %43 = sbr.rel (0) target = $region53
  $region52: #{chebnet_forward.1} parent=0 // pred_region
    _
  $region53: #{chebnet_forward.1} parent=0 // pred_fallthru
    _
  %v44 = vld [vmem:[%s0] sm:$0xff]
  %v45 = vld [vmem:[%s0 + $0x8] sm:$0xff]
  %v46 = vld [vmem:[%s2] sm:$0xff]
  %v47 = vld [vmem:[%s2 + $0x8] sm:$0xff]
  %v48 = vld [vmem:[%s1] sm:$0xff]
  %v49 = vld [vmem:[%s1 + $0x8] sm:$0xff]
  %vm50 = vcmask 130048
  %v52 = vsel %vm50, %v44, 0
  %v55 = vsel %vm50, %v45, 0
  %57 = vmatprep.subr.mxu0 0.0
  %58 = vmatpush1.msra.mxu0 %v48
  %59 = vmatprep.subr.mxu0 0.0
  %60 = vmatpush1.msra.mxu0 %v49
  %61 = vmatprep.subr.mxu0 0.0
  %62 = vmatpush1.msra.mxu0 0.0
  %63 = vmatprep.subr.mxu0 0.0
  %64 = vmatpush1.msra.mxu0 0.0
  %65 = vmatprep.subr.mxu0 0.0
  %66 = vmatpush1.msra.mxu0 0.0
  %67 = vmatprep.subr.mxu0 0.0
  %68 = vmatpush1.msra.mxu0 0.0
  %69 = vmatprep.subr.mxu0 0.0
  %70 = vmatpush1.msra.mxu0 0.0
  %71 = vmatprep.subr.mxu0 0.0
  %72 = vmatpush1.msra.mxu0 0.0
  %73 = vmatprep.subr.mxu0 0.0
  %74 = vmatpush1.msra.mxu0 0.0
  %75 = vmatprep.subr.mxu0 0.0
  %76 = vmatpush1.msra.mxu0 0.0
  %77 = vmatprep.subr.mxu0 0.0
  %78 = vmatpush1.msra.mxu0 0.0
  %79 = vmatprep.subr.mxu0 0.0
  %80 = vmatpush1.msra.mxu0 0.0
  %81 = vmatprep.subr.mxu0 0.0
  %82 = vmatpush1.msra.mxu0 0.0
  %83 = vmatprep.subr.mxu0 0.0
  %84 = vmatpush1.msra.mxu0 0.0
  %85 = vmatprep.subr.mxu0 0.0
  %86 = vmatpush1.msra.mxu0 0.0
  %87 = vmatprep.subr.mxu0 0.0
  %88 = vmatpush1.msra.mxu0 0.0
  %89 = vmatprep.subr.mxu0 0.0
  %90 = vmatpush1.msra.mxu0 0.0
  %91 = vmatprep.subr.mxu0 0.0
  %92 = vmatpush1.msra.mxu0 0.0
  %93 = vmatprep.subr.mxu0 0.0
  %94 = vmatpush1.msra.mxu0 0.0
  %95 = vmatprep.subr.mxu0 0.0
  %96 = vmatpush1.msra.mxu0 0.0
  %97 = vmatprep.subr.mxu0 0.0
  %98 = vmatpush1.msra.mxu0 0.0
  %99 = vmatprep.subr.mxu0 0.0
  %100 = vmatpush1.msra.mxu0 0.0
  %101 = vmatprep.subr.mxu0 0.0
  %102 = vmatpush1.msra.mxu0 0.0
  %103 = vmatprep.subr.mxu0 0.0
  %104 = vmatpush1.msra.mxu0 0.0
  %105 = vmatprep.subr.mxu0 0.0
  %106 = vmatpush1.msra.mxu0 0.0
  %107 = vmatprep.subr.mxu0 0.0
  %108 = vmatpush1.msra.mxu0 0.0
  %109 = vmatprep.subr.mxu0 0.0
  %110 = vmatpush1.msra.mxu0 0.0
  %111 = vmatprep.subr.mxu0 0.0
  %112 = vmatpush1.msra.mxu0 0.0
  %113 = vmatprep.subr.mxu0 0.0
  %114 = vmatpush1.msra.mxu0 0.0
  %115 = vmatprep.subr.mxu0 0.0
  %116 = vmatpush1.msra.mxu0 0.0
  %117 = vmatprep.subr.mxu0 0.0
  %118 = vmatpush1.msra.mxu0 0.0
  %119 = vmatprep.subr.mxu0 0.0
  %120 = vmatpush1.msra.mxu0 0.0
  %121 = vmatprep.mubr.f32.mxu0 0.0
  %122 = vmatmul.mubr.f32.gmra.mrb[0].mxu0 %v52
  %v123 = vpop.f32.mrb[0].mxu0
  %v124 = vadd.f32 0.0, %v123
  %v125 = vpop.f32.mrb[0].mxu0
  %126 = vmatprep.mubr.f32.mxu0 0.0
  %127 = vmatmul.mubr.f32.gmra.mrb[0].mxu0 %v55
  %v128 = vpop.f32.mrb[0].mxu0
  %v129 = vadd.f32 0.0, %v128
  %v130 = vpop.f32.mrb[0].mxu0
  %131 = vdwg.mxu0
  %v132 = vsub.f32 0.0, %v46
  %v133 = vsub.f32 0.0, %v47
  %135 = vset.pattern.permute.xlu0 0
  %136 = vperm.xlu0 %135, %v132
  %v137 = vpop.permute.xlu0 %136
  %140 = vset.pattern.permute.xlu0 0
  %141 = vperm.xlu0 %140, %v133
  %v142 = vpop.permute.xlu0 %141
  %v144 = vmul.f32 %v137, %v124
  %v145 = vmul.f32 %v142, %v129
  %v146 = vsub.f32 %v46, 1.0
  %v147 = vsub.f32 %v47, 1.0
  %149 = vset.pattern.permute.xlu0 0
  %150 = vperm.xlu0 %149, %v146
  %v151 = vpop.permute.xlu0 %150
  %154 = vset.pattern.permute.xlu0 0
  %155 = vperm.xlu0 %154, %v147
  %v156 = vpop.permute.xlu0 %155
  %v158 = vmul.f32 %v48, %v151
  %v159 = vmul.f32 %v49, %v156
  %v160 = vadd.f32 %v144, %v158
  %v161 = vadd.f32 %v145, %v159
  %162 = vmatprep.subr.mxu0 0.0
  %163 = vmatpush1.msra.mxu0 %v160
  %164 = vmatprep.subr.mxu0 0.0
  %165 = vmatpush1.msra.mxu0 %v161
  %166 = vmatprep.subr.mxu0 0.0
  %167 = vmatpush1.msra.mxu0 0.0
  %168 = vmatprep.subr.mxu0 0.0
  %169 = vmatpush1.msra.mxu0 0.0
  %170 = vmatprep.subr.mxu0 0.0
  %171 = vmatpush1.msra.mxu0 0.0
  %172 = vmatprep.subr.mxu0 0.0
  %173 = vmatpush1.msra.mxu0 0.0
  %174 = vmatprep.subr.mxu0 0.0
  %175 = vmatpush1.msra.mxu0 0.0
  %176 = vmatprep.subr.mxu0 0.0
  %177 = vmatpush1.msra.mxu0 0.0
  %178 = vmatprep.subr.mxu0 0.0
  %179 = vmatpush1.msra.mxu0 0.0
  %180 = vmatprep.subr.mxu0 0.0
  %181 = vmatpush1.msra.mxu0 0.0
  %182 = vmatprep.subr.mxu0 0.0
  %183 = vmatpush1.msra.mxu0 0.0
  %184 = vmatprep.subr.mxu0 0.0
  %185 = vmatpush1.msra.mxu0 0.0
  %186 = vmatprep.subr.mxu0 0.0
  %187 = vmatpush1.msra.mxu0 0.0
  %188 = vmatprep.subr.mxu0 0.0
  %189 = vmatpush1.msra.mxu0 0.0
  %190 = vmatprep.subr.mxu0 0.0
  %191 = vmatpush1.msra.mxu0 0.0
  %192 = vmatprep.subr.mxu0 0.0
  %193 = vmatpush1.msra.mxu0 0.0
  %194 = vmatprep.subr.mxu0 0.0
  %195 = vmatpush1.msra.mxu0 0.0
  %196 = vmatprep.subr.mxu0 0.0
  %197 = vmatpush1.msra.mxu0 0.0
  %198 = vmatprep.subr.mxu0 0.0
  %199 = vmatpush1.msra.mxu0 0.0
  %200 = vmatprep.subr.mxu0 0.0
  %201 = vmatpush1.msra.mxu0 0.0
  %202 = vmatprep.subr.mxu0 0.0
  %203 = vmatpush1.msra.mxu0 0.0
  %204 = vmatprep.subr.mxu0 0.0
  %205 = vmatpush1.msra.mxu0 0.0
  %206 = vmatprep.subr.mxu0 0.0
  %207 = vmatpush1.msra.mxu0 0.0
  %208 = vmatprep.subr.mxu0 0.0
  %209 = vmatpush1.msra.mxu0 0.0
  %210 = vmatprep.subr.mxu0 0.0
  %211 = vmatpush1.msra.mxu0 0.0
  %212 = vmatprep.subr.mxu0 0.0
  %213 = vmatpush1.msra.mxu0 0.0
  %214 = vmatprep.subr.mxu0 0.0
  %215 = vmatpush1.msra.mxu0 0.0
  %216 = vmatprep.subr.mxu0 0.0
  %217 = vmatpush1.msra.mxu0 0.0
  %218 = vmatprep.subr.mxu0 0.0
  %219 = vmatpush1.msra.mxu0 0.0
  %220 = vmatprep.subr.mxu0 0.0
  %221 = vmatpush1.msra.mxu0 0.0
  %222 = vmatprep.subr.mxu0 0.0
  %223 = vmatpush1.msra.mxu0 0.0
  %224 = vmatprep.subr.mxu0 0.0
  %225 = vmatpush1.msra.mxu0 0.0
  %226 = vmatprep.mubr.f32.mxu0 0.0
  %227 = vmatmul.mubr.f32.gmra.mrb[0].mxu0 %v52
  %v228 = vpop.f32.mrb[0].mxu0
  %v229 = vadd.f32 0.0, %v228
  %v230 = vpop.f32.mrb[0].mxu0
  %231 = vmatprep.mubr.f32.mxu0 0.0
  %232 = vmatmul.mubr.f32.gmra.mrb[0].mxu0 %v55
  %v233 = vpop.f32.mrb[0].mxu0
  %v234 = vadd.f32 0.0, %v233
  %v235 = vpop.f32.mrb[0].mxu0
  %236 = vdwg.mxu0
  %v237 = vmul.f32 %v46, -2.0
  %v238 = vmul.f32 %v47, -2.0
  %240 = vset.pattern.permute.xlu0 0
  %241 = vperm.xlu0 %240, %v237
  %v242 = vpop.permute.xlu0 %241
  %245 = vset.pattern.permute.xlu0 0
  %246 = vperm.xlu0 %245, %v238
  %v247 = vpop.permute.xlu0 %246
  %v249 = vmul.f32 %v242, %v229
  %v250 = vmul.f32 %v247, %v234
  %v251 = vmul.f32 %v146, 2.0
  %v252 = vmul.f32 %v147, 2.0
  %254 = vset.pattern.permute.xlu0 0
  %255 = vperm.xlu0 %254, %v251
  %v256 = vpop.permute.xlu0 %255
  %259 = vset.pattern.permute.xlu0 0
  %260 = vperm.xlu0 %259, %v252
  %v261 = vpop.permute.xlu0 %260
  %v263 = vmul.f32 %v160, %v256
  %v264 = vmul.f32 %v161, %v261
  %v265 = vadd.f32 %v249, %v263
  %v266 = vadd.f32 %v250, %v264
  %v267 = vsub.f32 %v265, %v48
  %v268 = vsub.f32 %v266, %v49
  %v269 = vld [vmem:[%s3] sm:$0xff]
  %v270 = vld [vmem:[%s3 + $0x8] sm:$0xff]
  %v271 = vld [vmem:[%s3 + $0x10] sm:$0xff]
  %v272 = vld [vmem:[%s3 + $0x18] sm:$0xff]
  %v273 = vld [vmem:[%s3 + $0x20] sm:$0xff]
  %v274 = vld [vmem:[%s3 + $0x28] sm:$0xff]
  %v275 = vld [vmem:[%s3 + $0x30] sm:$0xff]
  %v276 = vld [vmem:[%s3 + $0x38] sm:$0xff]
  %v277 = vld [vmem:[%s3 + $0x40] sm:$0xff]
  %v278 = vld [vmem:[%s3 + $0x48] sm:$0xff]
  %v279 = vld [vmem:[%s3 + $0x50] sm:$0xff]
  %v280 = vld [vmem:[%s3 + $0x58] sm:$0xff]
  %v281 = vld [vmem:[%s3 + $0x60] sm:$0xff]
  %v282 = vld [vmem:[%s3 + $0x68] sm:$0xff]
  %v283 = vld [vmem:[%s3 + $0x70] sm:$0xff]
  %v284 = vld [vmem:[%s3 + $0x78] sm:$0xff]
  %v285 = vld [vmem:[%s3 + $0x80] sm:$0xff]
  %v286 = vld [vmem:[%s3 + $0x88] sm:$0xff]
  %v287 = vld [vmem:[%s3 + $0x90] sm:$0xff]
  %v288 = vld [vmem:[%s3 + $0x98] sm:$0xff]
  %v289 = vld [vmem:[%s3 + $0xa0] sm:$0xff]
  %v290 = vld [vmem:[%s3 + $0xa8] sm:$0xff]
  %v291 = vld [vmem:[%s3 + $0xb0] sm:$0xff]
  %v292 = vld [vmem:[%s3 + $0xb8] sm:$0xff]
  %v293 = vld [vmem:[%s3 + $0xc0] sm:$0xff]
  %v294 = vld [vmem:[%s3 + $0xc8] sm:$0xff]
  %v295 = vld [vmem:[%s3 + $0xd0] sm:$0xff]
  %v296 = vld [vmem:[%s3 + $0xd8] sm:$0xff]
  %v297 = vld [vmem:[%s3 + $0xe0] sm:$0xff]
  %v298 = vld [vmem:[%s3 + $0xe8] sm:$0xff]
  %v299 = vld [vmem:[%s3 + $0xf0] sm:$0xff]
  %v300 = vld [vmem:[%s3 + $0xf8] sm:$0xff]
  %v301 = vld [vmem:[%s3 + $0x100] sm:$0xff]
  %v302 = vld [vmem:[%s3 + $0x108] sm:$0xff]
  %v303 = vld [vmem:[%s3 + $0x110] sm:$0xff]
  %v304 = vld [vmem:[%s3 + $0x118] sm:$0xff]
  %v305 = vld [vmem:[%s3 + $0x120] sm:$0xff]
  %v306 = vld [vmem:[%s3 + $0x128] sm:$0xff]
  %v307 = vld [vmem:[%s3 + $0x130] sm:$0xff]
  %v308 = vld [vmem:[%s3 + $0x138] sm:$0xff]
  %v309 = vld [vmem:[%s3 + $0x140] sm:$0xff]
  %v310 = vld [vmem:[%s3 + $0x148] sm:$0xff]
  %v311 = vld [vmem:[%s3 + $0x150] sm:$0xff]
  %v312 = vld [vmem:[%s3 + $0x158] sm:$0xff]
  %v313 = vld [vmem:[%s3 + $0x160] sm:$0xff]
  %v314 = vld [vmem:[%s3 + $0x168] sm:$0xff]
  %v315 = vld [vmem:[%s3 + $0x170] sm:$0xff]
  %v316 = vld [vmem:[%s3 + $0x178] sm:$0xff]
  %317 = vmatprep.subr.mxu0 0.0
  %318 = vmatpush1.msra.mxu0 %v269
  %319 = vmatprep.subr.mxu0 0.0
  %320 = vmatpush1.msra.mxu0 %v270
  %321 = vmatprep.subr.mxu0 0.0
  %322 = vmatpush1.msra.mxu0 %v271
  %323 = vmatprep.subr.mxu0 0.0
  %324 = vmatpush1.msra.mxu0 %v272
  %325 = vmatprep.subr.mxu0 0.0
  %326 = vmatpush1.msra.mxu0 %v273
  %327 = vmatprep.subr.mxu0 0.0
  %328 = vmatpush1.msra.mxu0 %v274
  %329 = vmatprep.subr.mxu0 0.0
  %330 = vmatpush1.msra.mxu0 %v275
  %331 = vmatprep.subr.mxu0 0.0
  %332 = vmatpush1.msra.mxu0 %v276
  %333 = vmatprep.subr.mxu0 0.0
  %334 = vmatpush1.msra.mxu0 %v277
  %335 = vmatprep.subr.mxu0 0.0
  %336 = vmatpush1.msra.mxu0 %v278
  %337 = vmatprep.subr.mxu0 0.0
  %338 = vmatpush1.msra.mxu0 %v279
  %339 = vmatprep.subr.mxu0 0.0
  %340 = vmatpush1.msra.mxu0 %v280
  %341 = vmatprep.subr.mxu0 0.0
  %342 = vmatpush1.msra.mxu0 %v281
  %343 = vmatprep.subr.mxu0 0.0
  %344 = vmatpush1.msra.mxu0 %v282
  %345 = vmatprep.subr.mxu0 0.0
  %346 = vmatpush1.msra.mxu0 %v283
  %347 = vmatprep.subr.mxu0 0.0
  %348 = vmatpush1.msra.mxu0 %v284
  %349 = vmatprep.subr.mxu0 0.0
  %350 = vmatpush1.msra.mxu0 %v285
  %351 = vmatprep.subr.mxu0 0.0
  %352 = vmatpush1.msra.mxu0 %v286
  %353 = vmatprep.subr.mxu0 0.0
  %354 = vmatpush1.msra.mxu0 %v287
  %355 = vmatprep.subr.mxu0 0.0
  %356 = vmatpush1.msra.mxu0 %v288
  %357 = vmatprep.subr.mxu0 0.0
  %358 = vmatpush1.msra.mxu0 %v289
  %359 = vmatprep.subr.mxu0 0.0
  %360 = vmatpush1.msra.mxu0 %v290
  %361 = vmatprep.subr.mxu0 0.0
  %362 = vmatpush1.msra.mxu0 %v291
  %363 = vmatprep.subr.mxu0 0.0
  %364 = vmatpush1.msra.mxu0 %v292
  %365 = vmatprep.subr.mxu0 0.0
  %366 = vmatpush1.msra.mxu0 %v293
  %367 = vmatprep.subr.mxu0 0.0
  %368 = vmatpush1.msra.mxu0 %v294
  %369 = vmatprep.subr.mxu0 0.0
  %370 = vmatpush1.msra.mxu0 %v295
  %371 = vmatprep.subr.mxu0 0.0
  %372 = vmatpush1.msra.mxu0 %v296
  %373 = vmatprep.subr.mxu0 0.0
  %374 = vmatpush1.msra.mxu0 %v297
  %375 = vmatprep.subr.mxu0 0.0
  %376 = vmatpush1.msra.mxu0 %v298
  %377 = vmatprep.subr.mxu0 0.0
  %378 = vmatpush1.msra.mxu0 %v299
  %379 = vmatprep.subr.mxu0 0.0
  %380 = vmatpush1.msra.mxu0 %v300
  %381 = vmatprep.mubr.f32.mxu0 %v160
  %382 = vmatmul.mubr.f32.gmra.mrb[0].mxu0 %v48
  %v383 = vpop.f32.mrb[0].mxu0
  %v384 = vadd.f32 0.0, %v383
  %v385 = vpop.f32.mrb[0].mxu0
  %386 = vmatprep.mubr.f32.mxu0 %v161
  %387 = vmatmul.mubr.f32.gmra.mrb[0].mxu0 %v49
  %v388 = vpop.f32.mrb[0].mxu0
  %v389 = vadd.f32 0.0, %v388
  %v390 = vpop.f32.mrb[0].mxu0
  %391 = vdwg.mxu0
  %392 = vmatprep.subr.mxu0 0.0
  %393 = vmatpush1.msra.mxu0 %v301
  %394 = vmatprep.subr.mxu0 0.0
  %395 = vmatpush1.msra.mxu0 %v302
  %396 = vmatprep.subr.mxu0 0.0
  %397 = vmatpush1.msra.mxu0 %v303
  %398 = vmatprep.subr.mxu0 0.0
  %399 = vmatpush1.msra.mxu0 %v304
  %400 = vmatprep.subr.mxu0 0.0
  %401 = vmatpush1.msra.mxu0 %v305
  %402 = vmatprep.subr.mxu0 0.0
  %403 = vmatpush1.msra.mxu0 %v306
  %404 = vmatprep.subr.mxu0 0.0
  %405 = vmatpush1.msra.mxu0 %v307
  %406 = vmatprep.subr.mxu0 0.0
  %407 = vmatpush1.msra.mxu0 %v308
  %408 = vmatprep.subr.mxu0 0.0
  %409 = vmatpush1.msra.mxu0 %v309
  %410 = vmatprep.subr.mxu0 0.0
  %411 = vmatpush1.msra.mxu0 %v310
  %412 = vmatprep.subr.mxu0 0.0
  %413 = vmatpush1.msra.mxu0 %v311
  %414 = vmatprep.subr.mxu0 0.0
  %415 = vmatpush1.msra.mxu0 %v312
  %416 = vmatprep.subr.mxu0 0.0
  %417 = vmatpush1.msra.mxu0 %v313
  %418 = vmatprep.subr.mxu0 0.0
  %419 = vmatpush1.msra.mxu0 %v314
  %420 = vmatprep.subr.mxu0 0.0
  %421 = vmatpush1.msra.mxu0 %v315
  %422 = vmatprep.subr.mxu0 0.0
  %423 = vmatpush1.msra.mxu0 %v316
  %424 = vmatprep.subr.mxu0 0.0
  %425 = vmatpush1.msra.mxu0 0.0
  %426 = vmatprep.subr.mxu0 0.0
  %427 = vmatpush1.msra.mxu0 0.0
  %428 = vmatprep.subr.mxu0 0.0
  %429 = vmatpush1.msra.mxu0 0.0
  %430 = vmatprep.subr.mxu0 0.0
  %431 = vmatpush1.msra.mxu0 0.0
  %432 = vmatprep.subr.mxu0 0.0
  %433 = vmatpush1.msra.mxu0 0.0
  %434 = vmatprep.subr.mxu0 0.0
  %435 = vmatpush1.msra.mxu0 0.0
  %436 = vmatprep.subr.mxu0 0.0
  %437 = vmatpush1.msra.mxu0 0.0
  %438 = vmatprep.subr.mxu0 0.0
  %439 = vmatpush1.msra.mxu0 0.0
  %440 = vmatprep.subr.mxu0 0.0
  %441 = vmatpush1.msra.mxu0 0.0
  %442 = vmatprep.subr.mxu0 0.0
  %443 = vmatpush1.msra.mxu0 0.0
  %444 = vmatprep.subr.mxu0 0.0
  %445 = vmatpush1.msra.mxu0 0.0
  %446 = vmatprep.subr.mxu0 0.0
  %447 = vmatpush1.msra.mxu0 0.0
  %448 = vmatprep.subr.mxu0 0.0
  %449 = vmatpush1.msra.mxu0 0.0
  %450 = vmatprep.subr.mxu0 0.0
  %451 = vmatpush1.msra.mxu0 0.0
  %452 = vmatprep.subr.mxu0 0.0
  %453 = vmatpush1.msra.mxu0 0.0
  %454 = vmatprep.subr.mxu0 0.0
  %455 = vmatpush1.msra.mxu0 0.0
  %456 = vmatprep.mubr.f32.mxu0 0.0
  %457 = vmatmul.mubr.f32.gmra.mrb[0].mxu0 %v267
  %v458 = vpop.f32.mrb[0].mxu0
  %v459 = vadd.f32 %v384, %v458
  %v460 = vpop.f32.mrb[0].mxu0
  %461 = vmatprep.mubr.f32.mxu0 0.0
  %462 = vmatmul.mubr.f32.gmra.mrb[0].mxu0 %v268
  %v463 = vpop.f32.mrb[0].mxu0
  %v464 = vadd.f32 %v389, %v463
  %v465 = vpop.f32.mrb[0].mxu0
  %466 = vdwg.mxu0
  %v467 = vld [vmem:[%s4] sm:$0x1]
  %v469 = vlaneseq
  %v470 = vshrl.u32 %v469, 7
  %v471 = vsub.s32 0, %v470
  %v472 = vrot.slane %v467, %v471
  %v474 = vmul.f32 %v459, %v472
  %v475 = vmul.f32 %v464, %v472
  %v476 = vld [vmem:[%s5] sm:$0x1]
  %v478 = vlaneseq
  %v479 = vshrl.u32 %v478, 7
  %v480 = vsub.s32 0, %v479
  %v481 = vrot.slane %v476, %v480
  %v483 = vadd.f32 %v474, %v481
  %v484 = vadd.f32 %v475, %v481
  %v485 = vmax.f32 %v483, 0.0
  %v486 = vmax.f32 %v484, 0.0
  %v487 = vadd.f32 %v48, %v485
  %v488 = vadd.f32 %v49, %v486
  %489 = vmatprep.subr.mxu0 0.0
  %490 = vmatpush1.msra.mxu0 %v487
  %491 = vmatprep.subr.mxu0 0.0
  %492 = vmatpush1.msra.mxu0 %v488
  %493 = vmatprep.subr.mxu0 0.0
  %494 = vmatpush1.msra.mxu0 0.0
  %495 = vmatprep.subr.mxu0 0.0
  %496 = vmatpush1.msra.mxu0 0.0
  %497 = vmatprep.subr.mxu0 0.0
  %498 = vmatpush1.msra.mxu0 0.0
  %499 = vmatprep.subr.mxu0 0.0
  %500 = vmatpush1.msra.mxu0 0.0
  %501 = vmatprep.subr.mxu0 0.0
  %502 = vmatpush1.msra.mxu0 0.0
  %503 = vmatprep.subr.mxu0 0.0
  %504 = vmatpush1.msra.mxu0 0.0
  %505 = vmatprep.subr.mxu0 0.0
  %506 = vmatpush1.msra.mxu0 0.0
  %507 = vmatprep.subr.mxu0 0.0
  %508 = vmatpush1.msra.mxu0 0.0
  %509 = vmatprep.subr.mxu0 0.0
  %510 = vmatpush1.msra.mxu0 0.0
  %511 = vmatprep.subr.mxu0 0.0
  %512 = vmatpush1.msra.mxu0 0.0
  %513 = vmatprep.subr.mxu0 0.0
  %514 = vmatpush1.msra.mxu0 0.0
  %515 = vmatprep.subr.mxu0 0.0
  %516 = vmatpush1.msra.mxu0 0.0
  %517 = vmatprep.subr.mxu0 0.0
  %518 = vmatpush1.msra.mxu0 0.0
  %519 = vmatprep.subr.mxu0 0.0
  %520 = vmatpush1.msra.mxu0 0.0
  %521 = vmatprep.subr.mxu0 0.0
  %522 = vmatpush1.msra.mxu0 0.0
  %523 = vmatprep.subr.mxu0 0.0
  %524 = vmatpush1.msra.mxu0 0.0
  %525 = vmatprep.subr.mxu0 0.0
  %526 = vmatpush1.msra.mxu0 0.0
  %527 = vmatprep.subr.mxu0 0.0
  %528 = vmatpush1.msra.mxu0 0.0
  %529 = vmatprep.subr.mxu0 0.0
  %530 = vmatpush1.msra.mxu0 0.0
  %531 = vmatprep.subr.mxu0 0.0
  %532 = vmatpush1.msra.mxu0 0.0
  %533 = vmatprep.subr.mxu0 0.0
  %534 = vmatpush1.msra.mxu0 0.0
  %535 = vmatprep.subr.mxu0 0.0
  %536 = vmatpush1.msra.mxu0 0.0
  %537 = vmatprep.subr.mxu0 0.0
  %538 = vmatpush1.msra.mxu0 0.0
  %539 = vmatprep.subr.mxu0 0.0
  %540 = vmatpush1.msra.mxu0 0.0
  %541 = vmatprep.subr.mxu0 0.0
  %542 = vmatpush1.msra.mxu0 0.0
  %543 = vmatprep.subr.mxu0 0.0
  %544 = vmatpush1.msra.mxu0 0.0
  %545 = vmatprep.subr.mxu0 0.0
  %546 = vmatpush1.msra.mxu0 0.0
  %547 = vmatprep.subr.mxu0 0.0
  %548 = vmatpush1.msra.mxu0 0.0
  %549 = vmatprep.subr.mxu0 0.0
  %550 = vmatpush1.msra.mxu0 0.0
  %551 = vmatprep.subr.mxu0 0.0
  %552 = vmatpush1.msra.mxu0 0.0
  %553 = vmatprep.mubr.f32.mxu0 0.0
  %554 = vmatmul.mubr.f32.gmra.mrb[0].mxu0 %v52
  %v555 = vpop.f32.mrb[0].mxu0
  %v556 = vadd.f32 0.0, %v555
  %v557 = vpop.f32.mrb[0].mxu0
  %558 = vmatprep.mubr.f32.mxu0 0.0
  %559 = vmatmul.mubr.f32.gmra.mrb[0].mxu0 %v55
  %v560 = vpop.f32.mrb[0].mxu0
  %v561 = vadd.f32 0.0, %v560
  %v562 = vpop.f32.mrb[0].mxu0
  %563 = vdwg.mxu0
  %v564 = vmul.f32 %v137, %v556
  %v565 = vmul.f32 %v142, %v561
  %v566 = vmul.f32 %v487, %v151
  %v567 = vmul.f32 %v488, %v156
  %v568 = vadd.f32 %v564, %v566
  %v569 = vadd.f32 %v565, %v567
  %570 = vmatprep.subr.mxu0 0.0
  %571 = vmatpush1.msra.mxu0 %v568
  %572 = vmatprep.subr.mxu0 0.0
  %573 = vmatpush1.msra.mxu0 %v569
  %574 = vmatprep.subr.mxu0 0.0
  %575 = vmatpush1.msra.mxu0 0.0
  %576 = vmatprep.subr.mxu0 0.0
  %577 = vmatpush1.msra.mxu0 0.0
  %578 = vmatprep.subr.mxu0 0.0
  %579 = vmatpush1.msra.mxu0 0.0
  %580 = vmatprep.subr.mxu0 0.0
  %581 = vmatpush1.msra.mxu0 0.0
  %582 = vmatprep.subr.mxu0 0.0
  %583 = vmatpush1.msra.mxu0 0.0
  %584 = vmatprep.subr.mxu0 0.0
  %585 = vmatpush1.msra.mxu0 0.0
  %586 = vmatprep.subr.mxu0 0.0
  %587 = vmatpush1.msra.mxu0 0.0
  %588 = vmatprep.subr.mxu0 0.0
  %589 = vmatpush1.msra.mxu0 0.0
  %590 = vmatprep.subr.mxu0 0.0
  %591 = vmatpush1.msra.mxu0 0.0
  %592 = vmatprep.subr.mxu0 0.0
  %593 = vmatpush1.msra.mxu0 0.0
  %594 = vmatprep.subr.mxu0 0.0
  %595 = vmatpush1.msra.mxu0 0.0
  %596 = vmatprep.subr.mxu0 0.0
  %597 = vmatpush1.msra.mxu0 0.0
  %598 = vmatprep.subr.mxu0 0.0
  %599 = vmatpush1.msra.mxu0 0.0
  %600 = vmatprep.subr.mxu0 0.0
  %601 = vmatpush1.msra.mxu0 0.0
  %602 = vmatprep.subr.mxu0 0.0
  %603 = vmatpush1.msra.mxu0 0.0
  %604 = vmatprep.subr.mxu0 0.0
  %605 = vmatpush1.msra.mxu0 0.0
  %606 = vmatprep.subr.mxu0 0.0
  %607 = vmatpush1.msra.mxu0 0.0
  %608 = vmatprep.subr.mxu0 0.0
  %609 = vmatpush1.msra.mxu0 0.0
  %610 = vmatprep.subr.mxu0 0.0
  %611 = vmatpush1.msra.mxu0 0.0
  %612 = vmatprep.subr.mxu0 0.0
  %613 = vmatpush1.msra.mxu0 0.0
  %614 = vmatprep.subr.mxu0 0.0
  %615 = vmatpush1.msra.mxu0 0.0
  %616 = vmatprep.subr.mxu0 0.0
  %617 = vmatpush1.msra.mxu0 0.0
  %618 = vmatprep.subr.mxu0 0.0
  %619 = vmatpush1.msra.mxu0 0.0
  %620 = vmatprep.subr.mxu0 0.0
  %621 = vmatpush1.msra.mxu0 0.0
  %622 = vmatprep.subr.mxu0 0.0
  %623 = vmatpush1.msra.mxu0 0.0
  %624 = vmatprep.subr.mxu0 0.0
  %625 = vmatpush1.msra.mxu0 0.0
  %626 = vmatprep.subr.mxu0 0.0
  %627 = vmatpush1.msra.mxu0 0.0
  %628 = vmatprep.subr.mxu0 0.0
  %629 = vmatpush1.msra.mxu0 0.0
  %630 = vmatprep.subr.mxu0 0.0
  %631 = vmatpush1.msra.mxu0 0.0
  %632 = vmatprep.subr.mxu0 0.0
  %633 = vmatpush1.msra.mxu0 0.0
  %634 = vmatprep.mubr.f32.mxu0 0.0
  %635 = vmatmul.mubr.f32.gmra.mrb[0].mxu0 %v52
  %v636 = vpop.f32.mrb[0].mxu0
  %v637 = vadd.f32 0.0, %v636
  %v638 = vpop.f32.mrb[0].mxu0
  %639 = vmatprep.mubr.f32.mxu0 0.0
  %640 = vmatmul.mubr.f32.gmra.mrb[0].mxu0 %v55
  %v641 = vpop.f32.mrb[0].mxu0
  %v642 = vadd.f32 0.0, %v641
  %v643 = vpop.f32.mrb[0].mxu0
  %644 = vdwg.mxu0
  %v645 = vmul.f32 %v242, %v637
  %v646 = vmul.f32 %v247, %v642
  %v647 = vmul.f32 %v568, %v256
  %v648 = vmul.f32 %v569, %v261
  %v649 = vadd.f32 %v645, %v647
  %v650 = vadd.f32 %v646, %v648
  %v651 = vsub.f32 %v649, %v487
  %v652 = vsub.f32 %v650, %v488
  %s653 = scalar_lea.vmem %s3, 384
  %v654 = vld [vmem:[%s653] sm:$0xff]
  %v655 = vld [vmem:[%s653 + $0x8] sm:$0xff]
  %v656 = vld [vmem:[%s653 + $0x10] sm:$0xff]
  %v657 = vld [vmem:[%s653 + $0x18] sm:$0xff]
  %v658 = vld [vmem:[%s653 + $0x20] sm:$0xff]
  %v659 = vld [vmem:[%s653 + $0x28] sm:$0xff]
  %v660 = vld [vmem:[%s653 + $0x30] sm:$0xff]
  %v661 = vld [vmem:[%s653 + $0x38] sm:$0xff]
  %v662 = vld [vmem:[%s653 + $0x40] sm:$0xff]
  %v663 = vld [vmem:[%s653 + $0x48] sm:$0xff]
  %v664 = vld [vmem:[%s653 + $0x50] sm:$0xff]
  %v665 = vld [vmem:[%s653 + $0x58] sm:$0xff]
  %v666 = vld [vmem:[%s653 + $0x60] sm:$0xff]
  %v667 = vld [vmem:[%s653 + $0x68] sm:$0xff]
  %v668 = vld [vmem:[%s653 + $0x70] sm:$0xff]
  %v669 = vld [vmem:[%s653 + $0x78] sm:$0xff]
  %v670 = vld [vmem:[%s653 + $0x80] sm:$0xff]
  %v671 = vld [vmem:[%s653 + $0x88] sm:$0xff]
  %v672 = vld [vmem:[%s653 + $0x90] sm:$0xff]
  %v673 = vld [vmem:[%s653 + $0x98] sm:$0xff]
  %v674 = vld [vmem:[%s653 + $0xa0] sm:$0xff]
  %v675 = vld [vmem:[%s653 + $0xa8] sm:$0xff]
  %v676 = vld [vmem:[%s653 + $0xb0] sm:$0xff]
  %v677 = vld [vmem:[%s653 + $0xb8] sm:$0xff]
  %v678 = vld [vmem:[%s653 + $0xc0] sm:$0xff]
  %v679 = vld [vmem:[%s653 + $0xc8] sm:$0xff]
  %v680 = vld [vmem:[%s653 + $0xd0] sm:$0xff]
  %v681 = vld [vmem:[%s653 + $0xd8] sm:$0xff]
  %v682 = vld [vmem:[%s653 + $0xe0] sm:$0xff]
  %v683 = vld [vmem:[%s653 + $0xe8] sm:$0xff]
  %v684 = vld [vmem:[%s653 + $0xf0] sm:$0xff]
  %v685 = vld [vmem:[%s653 + $0xf8] sm:$0xff]
  %v686 = vld [vmem:[%s653 + $0x100] sm:$0xff]
  %v687 = vld [vmem:[%s653 + $0x108] sm:$0xff]
  %v688 = vld [vmem:[%s653 + $0x110] sm:$0xff]
  %v689 = vld [vmem:[%s653 + $0x118] sm:$0xff]
  %v690 = vld [vmem:[%s653 + $0x120] sm:$0xff]
  %v691 = vld [vmem:[%s653 + $0x128] sm:$0xff]
  %v692 = vld [vmem:[%s653 + $0x130] sm:$0xff]
  %v693 = vld [vmem:[%s653 + $0x138] sm:$0xff]
  %v694 = vld [vmem:[%s653 + $0x140] sm:$0xff]
  %v695 = vld [vmem:[%s653 + $0x148] sm:$0xff]
  %v696 = vld [vmem:[%s653 + $0x150] sm:$0xff]
  %v697 = vld [vmem:[%s653 + $0x158] sm:$0xff]
  %v698 = vld [vmem:[%s653 + $0x160] sm:$0xff]
  %v699 = vld [vmem:[%s653 + $0x168] sm:$0xff]
  %v700 = vld [vmem:[%s653 + $0x170] sm:$0xff]
  %v701 = vld [vmem:[%s653 + $0x178] sm:$0xff]
  %702 = vmatprep.subr.mxu0 0.0
  %703 = vmatpush1.msra.mxu0 %v654
  %704 = vmatprep.subr.mxu0 0.0
  %705 = vmatpush1.msra.mxu0 %v655
  %706 = vmatprep.subr.mxu0 0.0
  %707 = vmatpush1.msra.mxu0 %v656
  %708 = vmatprep.subr.mxu0 0.0
  %709 = vmatpush1.msra.mxu0 %v657
  %710 = vmatprep.subr.mxu0 0.0
  %711 = vmatpush1.msra.mxu0 %v658
  %712 = vmatprep.subr.mxu0 0.0
  %713 = vmatpush1.msra.mxu0 %v659
  %714 = vmatprep.subr.mxu0 0.0
  %715 = vmatpush1.msra.mxu0 %v660
  %716 = vmatprep.subr.mxu0 0.0
  %717 = vmatpush1.msra.mxu0 %v661
  %718 = vmatprep.subr.mxu0 0.0
  %719 = vmatpush1.msra.mxu0 %v662
  %720 = vmatprep.subr.mxu0 0.0
  %721 = vmatpush1.msra.mxu0 %v663
  %722 = vmatprep.subr.mxu0 0.0
  %723 = vmatpush1.msra.mxu0 %v664
  %724 = vmatprep.subr.mxu0 0.0
  %725 = vmatpush1.msra.mxu0 %v665
  %726 = vmatprep.subr.mxu0 0.0
  %727 = vmatpush1.msra.mxu0 %v666
  %728 = vmatprep.subr.mxu0 0.0
  %729 = vmatpush1.msra.mxu0 %v667
  %730 = vmatprep.subr.mxu0 0.0
  %731 = vmatpush1.msra.mxu0 %v668
  %732 = vmatprep.subr.mxu0 0.0
  %733 = vmatpush1.msra.mxu0 %v669
  %734 = vmatprep.subr.mxu0 0.0
  %735 = vmatpush1.msra.mxu0 %v670
  %736 = vmatprep.subr.mxu0 0.0
  %737 = vmatpush1.msra.mxu0 %v671
  %738 = vmatprep.subr.mxu0 0.0
  %739 = vmatpush1.msra.mxu0 %v672
  %740 = vmatprep.subr.mxu0 0.0
  %741 = vmatpush1.msra.mxu0 %v673
  %742 = vmatprep.subr.mxu0 0.0
  %743 = vmatpush1.msra.mxu0 %v674
  %744 = vmatprep.subr.mxu0 0.0
  %745 = vmatpush1.msra.mxu0 %v675
  %746 = vmatprep.subr.mxu0 0.0
  %747 = vmatpush1.msra.mxu0 %v676
  %748 = vmatprep.subr.mxu0 0.0
  %749 = vmatpush1.msra.mxu0 %v677
  %750 = vmatprep.subr.mxu0 0.0
  %751 = vmatpush1.msra.mxu0 %v678
  %752 = vmatprep.subr.mxu0 0.0
  %753 = vmatpush1.msra.mxu0 %v679
  %754 = vmatprep.subr.mxu0 0.0
  %755 = vmatpush1.msra.mxu0 %v680
  %756 = vmatprep.subr.mxu0 0.0
  %757 = vmatpush1.msra.mxu0 %v681
  %758 = vmatprep.subr.mxu0 0.0
  %759 = vmatpush1.msra.mxu0 %v682
  %760 = vmatprep.subr.mxu0 0.0
  %761 = vmatpush1.msra.mxu0 %v683
  %762 = vmatprep.subr.mxu0 0.0
  %763 = vmatpush1.msra.mxu0 %v684
  %764 = vmatprep.subr.mxu0 0.0
  %765 = vmatpush1.msra.mxu0 %v685
  %766 = vmatprep.mubr.f32.mxu0 %v568
  %767 = vmatmul.mubr.f32.gmra.mrb[0].mxu0 %v487
  %v768 = vpop.f32.mrb[0].mxu0
  %v769 = vadd.f32 0.0, %v768
  %v770 = vpop.f32.mrb[0].mxu0
  %771 = vmatprep.mubr.f32.mxu0 %v569
  %772 = vmatmul.mubr.f32.gmra.mrb[0].mxu0 %v488
  %v773 = vpop.f32.mrb[0].mxu0
  %v774 = vadd.f32 0.0, %v773
  %v775 = vpop.f32.mrb[0].mxu0
  %776 = vdwg.mxu0
  %777 = vmatprep.subr.mxu0 0.0
  %778 = vmatpush1.msra.mxu0 %v686
  %779 = vmatprep.subr.mxu0 0.0
  %780 = vmatpush1.msra.mxu0 %v687
  %781 = vmatprep.subr.mxu0 0.0
  %782 = vmatpush1.msra.mxu0 %v688
  %783 = vmatprep.subr.mxu0 0.0
  %784 = vmatpush1.msra.mxu0 %v689
  %785 = vmatprep.subr.mxu0 0.0
  %786 = vmatpush1.msra.mxu0 %v690
  %787 = vmatprep.subr.mxu0 0.0
  %788 = vmatpush1.msra.mxu0 %v691
  %789 = vmatprep.subr.mxu0 0.0
  %790 = vmatpush1.msra.mxu0 %v692
  %791 = vmatprep.subr.mxu0 0.0
  %792 = vmatpush1.msra.mxu0 %v693
  %793 = vmatprep.subr.mxu0 0.0
  %794 = vmatpush1.msra.mxu0 %v694
  %795 = vmatprep.subr.mxu0 0.0
  %796 = vmatpush1.msra.mxu0 %v695
  %797 = vmatprep.subr.mxu0 0.0
  %798 = vmatpush1.msra.mxu0 %v696
  %799 = vmatprep.subr.mxu0 0.0
  %800 = vmatpush1.msra.mxu0 %v697
  %801 = vmatprep.subr.mxu0 0.0
  %802 = vmatpush1.msra.mxu0 %v698
  %803 = vmatprep.subr.mxu0 0.0
  %804 = vmatpush1.msra.mxu0 %v699
  %805 = vmatprep.subr.mxu0 0.0
  %806 = vmatpush1.msra.mxu0 %v700
  %807 = vmatprep.subr.mxu0 0.0
  %808 = vmatpush1.msra.mxu0 %v701
  %809 = vmatprep.subr.mxu0 0.0
  %810 = vmatpush1.msra.mxu0 0.0
  %811 = vmatprep.subr.mxu0 0.0
  %812 = vmatpush1.msra.mxu0 0.0
  %813 = vmatprep.subr.mxu0 0.0
  %814 = vmatpush1.msra.mxu0 0.0
  %815 = vmatprep.subr.mxu0 0.0
  %816 = vmatpush1.msra.mxu0 0.0
  %817 = vmatprep.subr.mxu0 0.0
  %818 = vmatpush1.msra.mxu0 0.0
  %819 = vmatprep.subr.mxu0 0.0
  %820 = vmatpush1.msra.mxu0 0.0
  %821 = vmatprep.subr.mxu0 0.0
  %822 = vmatpush1.msra.mxu0 0.0
  %823 = vmatprep.subr.mxu0 0.0
  %824 = vmatpush1.msra.mxu0 0.0
  %825 = vmatprep.subr.mxu0 0.0
  %826 = vmatpush1.msra.mxu0 0.0
  %827 = vmatprep.subr.mxu0 0.0
  %828 = vmatpush1.msra.mxu0 0.0
  %829 = vmatprep.subr.mxu0 0.0
  %830 = vmatpush1.msra.mxu0 0.0
  %831 = vmatprep.subr.mxu0 0.0
  %832 = vmatpush1.msra.mxu0 0.0
  %833 = vmatprep.subr.mxu0 0.0
  %834 = vmatpush1.msra.mxu0 0.0
  %835 = vmatprep.subr.mxu0 0.0
  %836 = vmatpush1.msra.mxu0 0.0
  %837 = vmatprep.subr.mxu0 0.0
  %838 = vmatpush1.msra.mxu0 0.0
  %839 = vmatprep.subr.mxu0 0.0
  %840 = vmatpush1.msra.mxu0 0.0
  %841 = vmatprep.mubr.f32.mxu0 0.0
  %842 = vmatmul.mubr.f32.gmra.mrb[0].mxu0 %v651
  %v843 = vpop.f32.mrb[0].mxu0
  %v844 = vadd.f32 %v769, %v843
  %v845 = vpop.f32.mrb[0].mxu0
  %846 = vmatprep.mubr.f32.mxu0 0.0
  %847 = vmatmul.mubr.f32.gmra.mrb[0].mxu0 %v652
  %v848 = vpop.f32.mrb[0].mxu0
  %v849 = vadd.f32 %v774, %v848
  %v850 = vpop.f32.mrb[0].mxu0
  %851 = vdwg.mxu0
  %s852 = scalar_lea.vmem %s4, 1
  %v853 = vld [vmem:[%s852] sm:$0x1]
  %v855 = vlaneseq
  %v856 = vshrl.u32 %v855, 7
  %v857 = vsub.s32 0, %v856
  %v858 = vrot.slane %v853, %v857
  %v860 = vmul.f32 %v844, %v858
  %v861 = vmul.f32 %v849, %v858
  %s862 = scalar_lea.vmem %s5, 1
  %v863 = vld [vmem:[%s862] sm:$0x1]
  %v865 = vlaneseq
  %v866 = vshrl.u32 %v865, 7
  %v867 = vsub.s32 0, %v866
  %v868 = vrot.slane %v863, %v867
  %v870 = vadd.f32 %v860, %v868
  %v871 = vadd.f32 %v861, %v868
  %v872 = vmax.f32 %v870, 0.0
  %v873 = vmax.f32 %v871, 0.0
  %v874 = vadd.f32 %v487, %v872
  %v875 = vadd.f32 %v488, %v873
  %876 = vmatprep.subr.mxu0 0.0
  %877 = vmatpush1.msra.mxu0 %v874
  %878 = vmatprep.subr.mxu0 0.0
  %879 = vmatpush1.msra.mxu0 %v875
  %880 = vmatprep.subr.mxu0 0.0
  %881 = vmatpush1.msra.mxu0 0.0
  %882 = vmatprep.subr.mxu0 0.0
  %883 = vmatpush1.msra.mxu0 0.0
  %884 = vmatprep.subr.mxu0 0.0
  %885 = vmatpush1.msra.mxu0 0.0
  %886 = vmatprep.subr.mxu0 0.0
  %887 = vmatpush1.msra.mxu0 0.0
  %888 = vmatprep.subr.mxu0 0.0
  %889 = vmatpush1.msra.mxu0 0.0
  %890 = vmatprep.subr.mxu0 0.0
  %891 = vmatpush1.msra.mxu0 0.0
  %892 = vmatprep.subr.mxu0 0.0
  %893 = vmatpush1.msra.mxu0 0.0
  %894 = vmatprep.subr.mxu0 0.0
  %895 = vmatpush1.msra.mxu0 0.0
  %896 = vmatprep.subr.mxu0 0.0
  %897 = vmatpush1.msra.mxu0 0.0
  %898 = vmatprep.subr.mxu0 0.0
  %899 = vmatpush1.msra.mxu0 0.0
  %900 = vmatprep.subr.mxu0 0.0
  %901 = vmatpush1.msra.mxu0 0.0
  %902 = vmatprep.subr.mxu0 0.0
  %903 = vmatpush1.msra.mxu0 0.0
  %904 = vmatprep.subr.mxu0 0.0
  %905 = vmatpush1.msra.mxu0 0.0
  %906 = vmatprep.subr.mxu0 0.0
  %907 = vmatpush1.msra.mxu0 0.0
  %908 = vmatprep.subr.mxu0 0.0
  %909 = vmatpush1.msra.mxu0 0.0
  %910 = vmatprep.subr.mxu0 0.0
  %911 = vmatpush1.msra.mxu0 0.0
  %912 = vmatprep.subr.mxu0 0.0
  %913 = vmatpush1.msra.mxu0 0.0
  %914 = vmatprep.subr.mxu0 0.0
  %915 = vmatpush1.msra.mxu0 0.0
  %916 = vmatprep.subr.mxu0 0.0
  %917 = vmatpush1.msra.mxu0 0.0
  %918 = vmatprep.subr.mxu0 0.0
  %919 = vmatpush1.msra.mxu0 0.0
  %920 = vmatprep.subr.mxu0 0.0
  %921 = vmatpush1.msra.mxu0 0.0
  %922 = vmatprep.subr.mxu0 0.0
  %923 = vmatpush1.msra.mxu0 0.0
  %924 = vmatprep.subr.mxu0 0.0
  %925 = vmatpush1.msra.mxu0 0.0
  %926 = vmatprep.subr.mxu0 0.0
  %927 = vmatpush1.msra.mxu0 0.0
  %928 = vmatprep.subr.mxu0 0.0
  %929 = vmatpush1.msra.mxu0 0.0
  %930 = vmatprep.subr.mxu0 0.0
  %931 = vmatpush1.msra.mxu0 0.0
  %932 = vmatprep.subr.mxu0 0.0
  %933 = vmatpush1.msra.mxu0 0.0
  %934 = vmatprep.subr.mxu0 0.0
  %935 = vmatpush1.msra.mxu0 0.0
  %936 = vmatprep.subr.mxu0 0.0
  %937 = vmatpush1.msra.mxu0 0.0
  %938 = vmatprep.subr.mxu0 0.0
  %939 = vmatpush1.msra.mxu0 0.0
  %940 = vmatprep.mubr.f32.mxu0 0.0
  %941 = vmatmul.mubr.f32.gmra.mrb[0].mxu0 %v52
  %v942 = vpop.f32.mrb[0].mxu0
  %v943 = vadd.f32 0.0, %v942
  %v944 = vpop.f32.mrb[0].mxu0
  %945 = vmatprep.mubr.f32.mxu0 0.0
  %946 = vmatmul.mubr.f32.gmra.mrb[0].mxu0 %v55
  %v947 = vpop.f32.mrb[0].mxu0
  %v948 = vadd.f32 0.0, %v947
  %v949 = vpop.f32.mrb[0].mxu0
  %950 = vdwg.mxu0
  %v951 = vmul.f32 %v137, %v943
  %v952 = vmul.f32 %v142, %v948
  %v953 = vmul.f32 %v874, %v151
  %v954 = vmul.f32 %v875, %v156
  %v955 = vadd.f32 %v951, %v953
  %v956 = vadd.f32 %v952, %v954
  %957 = vmatprep.subr.mxu0 0.0
  %958 = vmatpush1.msra.mxu0 %v955
  %959 = vmatprep.subr.mxu0 0.0
  %960 = vmatpush1.msra.mxu0 %v956
  %961 = vmatprep.subr.mxu0 0.0
  %962 = vmatpush1.msra.mxu0 0.0
  %963 = vmatprep.subr.mxu0 0.0
  %964 = vmatpush1.msra.mxu0 0.0
  %965 = vmatprep.subr.mxu0 0.0
  %966 = vmatpush1.msra.mxu0 0.0
  %967 = vmatprep.subr.mxu0 0.0
  %968 = vmatpush1.msra.mxu0 0.0
  %969 = vmatprep.subr.mxu0 0.0
  %970 = vmatpush1.msra.mxu0 0.0
  %971 = vmatprep.subr.mxu0 0.0
  %972 = vmatpush1.msra.mxu0 0.0
  %973 = vmatprep.subr.mxu0 0.0
  %974 = vmatpush1.msra.mxu0 0.0
  %975 = vmatprep.subr.mxu0 0.0
  %976 = vmatpush1.msra.mxu0 0.0
  %977 = vmatprep.subr.mxu0 0.0
  %978 = vmatpush1.msra.mxu0 0.0
  %979 = vmatprep.subr.mxu0 0.0
  %980 = vmatpush1.msra.mxu0 0.0
  %981 = vmatprep.subr.mxu0 0.0
  %982 = vmatpush1.msra.mxu0 0.0
  %983 = vmatprep.subr.mxu0 0.0
  %984 = vmatpush1.msra.mxu0 0.0
  %985 = vmatprep.subr.mxu0 0.0
  %986 = vmatpush1.msra.mxu0 0.0
  %987 = vmatprep.subr.mxu0 0.0
  %988 = vmatpush1.msra.mxu0 0.0
  %989 = vmatprep.subr.mxu0 0.0
  %990 = vmatpush1.msra.mxu0 0.0
  %991 = vmatprep.subr.mxu0 0.0
  %992 = vmatpush1.msra.mxu0 0.0
  %993 = vmatprep.subr.mxu0 0.0
  %994 = vmatpush1.msra.mxu0 0.0
  %995 = vmatprep.subr.mxu0 0.0
  %996 = vmatpush1.msra.mxu0 0.0
  %997 = vmatprep.subr.mxu0 0.0
  %998 = vmatpush1.msra.mxu0 0.0
  %999 = vmatprep.subr.mxu0 0.0
  %1000 = vmatpush1.msra.mxu0 0.0
  %1001 = vmatprep.subr.mxu0 0.0
  %1002 = vmatpush1.msra.mxu0 0.0
  %1003 = vmatprep.subr.mxu0 0.0
  %1004 = vmatpush1.msra.mxu0 0.0
  %1005 = vmatprep.subr.mxu0 0.0
  %1006 = vmatpush1.msra.mxu0 0.0
  %1007 = vmatprep.subr.mxu0 0.0
  %1008 = vmatpush1.msra.mxu0 0.0
  %1009 = vmatprep.subr.mxu0 0.0
  %1010 = vmatpush1.msra.mxu0 0.0
  %1011 = vmatprep.subr.mxu0 0.0
  %1012 = vmatpush1.msra.mxu0 0.0
  %1013 = vmatprep.subr.mxu0 0.0
  %1014 = vmatpush1.msra.mxu0 0.0
  %1015 = vmatprep.subr.mxu0 0.0
  %1016 = vmatpush1.msra.mxu0 0.0
  %1017 = vmatprep.subr.mxu0 0.0
  %1018 = vmatpush1.msra.mxu0 0.0
  %1019 = vmatprep.subr.mxu0 0.0
  %1020 = vmatpush1.msra.mxu0 0.0
  %1021 = vmatprep.mubr.f32.mxu0 0.0
  %1022 = vmatmul.mubr.f32.gmra.mrb[0].mxu0 %v52
  %v1023 = vpop.f32.mrb[0].mxu0
  %v1024 = vadd.f32 0.0, %v1023
  %v1025 = vpop.f32.mrb[0].mxu0
  %1026 = vmatprep.mubr.f32.mxu0 0.0
  %1027 = vmatmul.mubr.f32.gmra.mrb[0].mxu0 %v55
  %v1028 = vpop.f32.mrb[0].mxu0
  %v1029 = vadd.f32 0.0, %v1028
  %v1030 = vpop.f32.mrb[0].mxu0
  %1031 = vdwg.mxu0
  %v1032 = vmul.f32 %v242, %v1024
  %v1033 = vmul.f32 %v247, %v1029
  %v1034 = vmul.f32 %v955, %v256
  %v1035 = vmul.f32 %v956, %v261
  %v1036 = vadd.f32 %v1032, %v1034
  %v1037 = vadd.f32 %v1033, %v1035
  %v1038 = vsub.f32 %v1036, %v874
  %v1039 = vsub.f32 %v1037, %v875
  %s1040 = scalar_lea.vmem %s3, 768
  %v1041 = vld [vmem:[%s1040] sm:$0xff]
  %v1042 = vld [vmem:[%s1040 + $0x8] sm:$0xff]
  %v1043 = vld [vmem:[%s1040 + $0x10] sm:$0xff]
  %v1044 = vld [vmem:[%s1040 + $0x18] sm:$0xff]
  %v1045 = vld [vmem:[%s1040 + $0x20] sm:$0xff]
  %v1046 = vld [vmem:[%s1040 + $0x28] sm:$0xff]
  %v1047 = vld [vmem:[%s1040 + $0x30] sm:$0xff]
  %v1048 = vld [vmem:[%s1040 + $0x38] sm:$0xff]
  %v1049 = vld [vmem:[%s1040 + $0x40] sm:$0xff]
  %v1050 = vld [vmem:[%s1040 + $0x48] sm:$0xff]
  %v1051 = vld [vmem:[%s1040 + $0x50] sm:$0xff]
  %v1052 = vld [vmem:[%s1040 + $0x58] sm:$0xff]
  %v1053 = vld [vmem:[%s1040 + $0x60] sm:$0xff]
  %v1054 = vld [vmem:[%s1040 + $0x68] sm:$0xff]
  %v1055 = vld [vmem:[%s1040 + $0x70] sm:$0xff]
  %v1056 = vld [vmem:[%s1040 + $0x78] sm:$0xff]
  %v1057 = vld [vmem:[%s1040 + $0x80] sm:$0xff]
  %v1058 = vld [vmem:[%s1040 + $0x88] sm:$0xff]
  %v1059 = vld [vmem:[%s1040 + $0x90] sm:$0xff]
  %v1060 = vld [vmem:[%s1040 + $0x98] sm:$0xff]
  %v1061 = vld [vmem:[%s1040 + $0xa0] sm:$0xff]
  %v1062 = vld [vmem:[%s1040 + $0xa8] sm:$0xff]
  %v1063 = vld [vmem:[%s1040 + $0xb0] sm:$0xff]
  %v1064 = vld [vmem:[%s1040 + $0xb8] sm:$0xff]
  %v1065 = vld [vmem:[%s1040 + $0xc0] sm:$0xff]
  %v1066 = vld [vmem:[%s1040 + $0xc8] sm:$0xff]
  %v1067 = vld [vmem:[%s1040 + $0xd0] sm:$0xff]
  %v1068 = vld [vmem:[%s1040 + $0xd8] sm:$0xff]
  %v1069 = vld [vmem:[%s1040 + $0xe0] sm:$0xff]
  %v1070 = vld [vmem:[%s1040 + $0xe8] sm:$0xff]
  %v1071 = vld [vmem:[%s1040 + $0xf0] sm:$0xff]
  %v1072 = vld [vmem:[%s1040 + $0xf8] sm:$0xff]
  %v1073 = vld [vmem:[%s1040 + $0x100] sm:$0xff]
  %v1074 = vld [vmem:[%s1040 + $0x108] sm:$0xff]
  %v1075 = vld [vmem:[%s1040 + $0x110] sm:$0xff]
  %v1076 = vld [vmem:[%s1040 + $0x118] sm:$0xff]
  %v1077 = vld [vmem:[%s1040 + $0x120] sm:$0xff]
  %v1078 = vld [vmem:[%s1040 + $0x128] sm:$0xff]
  %v1079 = vld [vmem:[%s1040 + $0x130] sm:$0xff]
  %v1080 = vld [vmem:[%s1040 + $0x138] sm:$0xff]
  %v1081 = vld [vmem:[%s1040 + $0x140] sm:$0xff]
  %v1082 = vld [vmem:[%s1040 + $0x148] sm:$0xff]
  %v1083 = vld [vmem:[%s1040 + $0x150] sm:$0xff]
  %v1084 = vld [vmem:[%s1040 + $0x158] sm:$0xff]
  %v1085 = vld [vmem:[%s1040 + $0x160] sm:$0xff]
  %v1086 = vld [vmem:[%s1040 + $0x168] sm:$0xff]
  %v1087 = vld [vmem:[%s1040 + $0x170] sm:$0xff]
  %v1088 = vld [vmem:[%s1040 + $0x178] sm:$0xff]
  %1089 = vmatprep.subr.mxu0 0.0
  %1090 = vmatpush1.msra.mxu0 %v1041
  %1091 = vmatprep.subr.mxu0 0.0
  %1092 = vmatpush1.msra.mxu0 %v1042
  %1093 = vmatprep.subr.mxu0 0.0
  %1094 = vmatpush1.msra.mxu0 %v1043
  %1095 = vmatprep.subr.mxu0 0.0
  %1096 = vmatpush1.msra.mxu0 %v1044
  %1097 = vmatprep.subr.mxu0 0.0
  %1098 = vmatpush1.msra.mxu0 %v1045
  %1099 = vmatprep.subr.mxu0 0.0
  %1100 = vmatpush1.msra.mxu0 %v1046
  %1101 = vmatprep.subr.mxu0 0.0
  %1102 = vmatpush1.msra.mxu0 %v1047
  %1103 = vmatprep.subr.mxu0 0.0
  %1104 = vmatpush1.msra.mxu0 %v1048
  %1105 = vmatprep.subr.mxu0 0.0
  %1106 = vmatpush1.msra.mxu0 %v1049
  %1107 = vmatprep.subr.mxu0 0.0
  %1108 = vmatpush1.msra.mxu0 %v1050
  %1109 = vmatprep.subr.mxu0 0.0
  %1110 = vmatpush1.msra.mxu0 %v1051
  %1111 = vmatprep.subr.mxu0 0.0
  %1112 = vmatpush1.msra.mxu0 %v1052
  %1113 = vmatprep.subr.mxu0 0.0
  %1114 = vmatpush1.msra.mxu0 %v1053
  %1115 = vmatprep.subr.mxu0 0.0
  %1116 = vmatpush1.msra.mxu0 %v1054
  %1117 = vmatprep.subr.mxu0 0.0
  %1118 = vmatpush1.msra.mxu0 %v1055
  %1119 = vmatprep.subr.mxu0 0.0
  %1120 = vmatpush1.msra.mxu0 %v1056
  %1121 = vmatprep.subr.mxu0 0.0
  %1122 = vmatpush1.msra.mxu0 %v1057
  %1123 = vmatprep.subr.mxu0 0.0
  %1124 = vmatpush1.msra.mxu0 %v1058
  %1125 = vmatprep.subr.mxu0 0.0
  %1126 = vmatpush1.msra.mxu0 %v1059
  %1127 = vmatprep.subr.mxu0 0.0
  %1128 = vmatpush1.msra.mxu0 %v1060
  %1129 = vmatprep.subr.mxu0 0.0
  %1130 = vmatpush1.msra.mxu0 %v1061
  %1131 = vmatprep.subr.mxu0 0.0
  %1132 = vmatpush1.msra.mxu0 %v1062
  %1133 = vmatprep.subr.mxu0 0.0
  %1134 = vmatpush1.msra.mxu0 %v1063
  %1135 = vmatprep.subr.mxu0 0.0
  %1136 = vmatpush1.msra.mxu0 %v1064
  %1137 = vmatprep.subr.mxu0 0.0
  %1138 = vmatpush1.msra.mxu0 %v1065
  %1139 = vmatprep.subr.mxu0 0.0
  %1140 = vmatpush1.msra.mxu0 %v1066
  %1141 = vmatprep.subr.mxu0 0.0
  %1142 = vmatpush1.msra.mxu0 %v1067
  %1143 = vmatprep.subr.mxu0 0.0
  %1144 = vmatpush1.msra.mxu0 %v1068
  %1145 = vmatprep.subr.mxu0 0.0
  %1146 = vmatpush1.msra.mxu0 %v1069
  %1147 = vmatprep.subr.mxu0 0.0
  %1148 = vmatpush1.msra.mxu0 %v1070
  %1149 = vmatprep.subr.mxu0 0.0
  %1150 = vmatpush1.msra.mxu0 %v1071
  %1151 = vmatprep.subr.mxu0 0.0
  %1152 = vmatpush1.msra.mxu0 %v1072
  %1153 = vmatprep.mubr.f32.mxu0 %v955
  %1154 = vmatmul.mubr.f32.gmra.mrb[0].mxu0 %v874
  %v1155 = vpop.f32.mrb[0].mxu0
  %v1156 = vadd.f32 0.0, %v1155
  %v1157 = vpop.f32.mrb[0].mxu0
  %1158 = vmatprep.mubr.f32.mxu0 %v956
  %1159 = vmatmul.mubr.f32.gmra.mrb[0].mxu0 %v875
  %v1160 = vpop.f32.mrb[0].mxu0
  %v1161 = vadd.f32 0.0, %v1160
  %v1162 = vpop.f32.mrb[0].mxu0
  %1163 = vdwg.mxu0
  %1164 = vmatprep.subr.mxu0 0.0
  %1165 = vmatpush1.msra.mxu0 %v1073
  %1166 = vmatprep.subr.mxu0 0.0
  %1167 = vmatpush1.msra.mxu0 %v1074
  %1168 = vmatprep.subr.mxu0 0.0
  %1169 = vmatpush1.msra.mxu0 %v1075
  %1170 = vmatprep.subr.mxu0 0.0
  %1171 = vmatpush1.msra.mxu0 %v1076
  %1172 = vmatprep.subr.mxu0 0.0
  %1173 = vmatpush1.msra.mxu0 %v1077
  %1174 = vmatprep.subr.mxu0 0.0
  %1175 = vmatpush1.msra.mxu0 %v1078
  %1176 = vmatprep.subr.mxu0 0.0
  %1177 = vmatpush1.msra.mxu0 %v1079
  %1178 = vmatprep.subr.mxu0 0.0
  %1179 = vmatpush1.msra.mxu0 %v1080
  %1180 = vmatprep.subr.mxu0 0.0
  %1181 = vmatpush1.msra.mxu0 %v1081
  %1182 = vmatprep.subr.mxu0 0.0
  %1183 = vmatpush1.msra.mxu0 %v1082
  %1184 = vmatprep.subr.mxu0 0.0
  %1185 = vmatpush1.msra.mxu0 %v1083
  %1186 = vmatprep.subr.mxu0 0.0
  %1187 = vmatpush1.msra.mxu0 %v1084
  %1188 = vmatprep.subr.mxu0 0.0
  %1189 = vmatpush1.msra.mxu0 %v1085
  %1190 = vmatprep.subr.mxu0 0.0
  %1191 = vmatpush1.msra.mxu0 %v1086
  %1192 = vmatprep.subr.mxu0 0.0
  %1193 = vmatpush1.msra.mxu0 %v1087
  %1194 = vmatprep.subr.mxu0 0.0
  %1195 = vmatpush1.msra.mxu0 %v1088
  %1196 = vmatprep.subr.mxu0 0.0
  %1197 = vmatpush1.msra.mxu0 0.0
  %1198 = vmatprep.subr.mxu0 0.0
  %1199 = vmatpush1.msra.mxu0 0.0
  %1200 = vmatprep.subr.mxu0 0.0
  %1201 = vmatpush1.msra.mxu0 0.0
  %1202 = vmatprep.subr.mxu0 0.0
  %1203 = vmatpush1.msra.mxu0 0.0
  %1204 = vmatprep.subr.mxu0 0.0
  %1205 = vmatpush1.msra.mxu0 0.0
  %1206 = vmatprep.subr.mxu0 0.0
  %1207 = vmatpush1.msra.mxu0 0.0
  %1208 = vmatprep.subr.mxu0 0.0
  %1209 = vmatpush1.msra.mxu0 0.0
  %1210 = vmatprep.subr.mxu0 0.0
  %1211 = vmatpush1.msra.mxu0 0.0
  %1212 = vmatprep.subr.mxu0 0.0
  %1213 = vmatpush1.msra.mxu0 0.0
  %1214 = vmatprep.subr.mxu0 0.0
  %1215 = vmatpush1.msra.mxu0 0.0
  %1216 = vmatprep.subr.mxu0 0.0
  %1217 = vmatpush1.msra.mxu0 0.0
  %1218 = vmatprep.subr.mxu0 0.0
  %1219 = vmatpush1.msra.mxu0 0.0
  %1220 = vmatprep.subr.mxu0 0.0
  %1221 = vmatpush1.msra.mxu0 0.0
  %1222 = vmatprep.subr.mxu0 0.0
  %1223 = vmatpush1.msra.mxu0 0.0
  %1224 = vmatprep.subr.mxu0 0.0
  %1225 = vmatpush1.msra.mxu0 0.0
  %1226 = vmatprep.subr.mxu0 0.0
  %1227 = vmatpush1.msra.mxu0 0.0
  %1228 = vmatprep.mubr.f32.mxu0 0.0
  %1229 = vmatmul.mubr.f32.gmra.mrb[0].mxu0 %v1038
  %v1230 = vpop.f32.mrb[0].mxu0
  %v1231 = vadd.f32 %v1156, %v1230
  %v1232 = vpop.f32.mrb[0].mxu0
  %1233 = vmatprep.mubr.f32.mxu0 0.0
  %1234 = vmatmul.mubr.f32.gmra.mrb[0].mxu0 %v1039
  %v1235 = vpop.f32.mrb[0].mxu0
  %v1236 = vadd.f32 %v1161, %v1235
  %v1237 = vpop.f32.mrb[0].mxu0
  %1238 = vdwg.mxu0
  %s1239 = scalar_lea.vmem %s4, 2
  %v1240 = vld [vmem:[%s1239] sm:$0x1]
  %v1242 = vlaneseq
  %v1243 = vshrl.u32 %v1242, 7
  %v1244 = vsub.s32 0, %v1243
  %v1245 = vrot.slane %v1240, %v1244
  %v1247 = vmul.f32 %v1231, %v1245
  %v1248 = vmul.f32 %v1236, %v1245
  %s1249 = scalar_lea.vmem %s5, 2
  %v1250 = vld [vmem:[%s1249] sm:$0x1]
  %v1252 = vlaneseq
  %v1253 = vshrl.u32 %v1252, 7
  %v1254 = vsub.s32 0, %v1253
  %v1255 = vrot.slane %v1250, %v1254
  %v1257 = vadd.f32 %v1247, %v1255
  %v1258 = vadd.f32 %v1248, %v1255
  %v1259 = vmax.f32 %v1257, 0.0
  %v1260 = vmax.f32 %v1258, 0.0
  %v1261 = vadd.f32 %v874, %v1259
  %v1262 = vadd.f32 %v875, %v1260
  %v1263 = vld [vmem:[%s6] sm:$0xff]
  %v1265 = vsel %vm50, %v1263, 0
  %1267 = vmatprep.subr.mxu0 0.0
  %1268 = vmatpush1.msra.mxu0 %v1261
  %1269 = vmatprep.subr.mxu0 0.0
  %1270 = vmatpush1.msra.mxu0 %v1262
  %1271 = vmatprep.subr.mxu0 0.0
  %1272 = vmatpush1.msra.mxu0 0.0
  %1273 = vmatprep.subr.mxu0 0.0
  %1274 = vmatpush1.msra.mxu0 0.0
  %1275 = vmatprep.subr.mxu0 0.0
  %1276 = vmatpush1.msra.mxu0 0.0
  %1277 = vmatprep.subr.mxu0 0.0
  %1278 = vmatpush1.msra.mxu0 0.0
  %1279 = vmatprep.subr.mxu0 0.0
  %1280 = vmatpush1.msra.mxu0 0.0
  %1281 = vmatprep.subr.mxu0 0.0
  %1282 = vmatpush1.msra.mxu0 0.0
  %1283 = vmatprep.subr.mxu0 0.0
  %1284 = vmatpush1.msra.mxu0 0.0
  %1285 = vmatprep.subr.mxu0 0.0
  %1286 = vmatpush1.msra.mxu0 0.0
  %1287 = vmatprep.subr.mxu0 0.0
  %1288 = vmatpush1.msra.mxu0 0.0
  %1289 = vmatprep.subr.mxu0 0.0
  %1290 = vmatpush1.msra.mxu0 0.0
  %1291 = vmatprep.subr.mxu0 0.0
  %1292 = vmatpush1.msra.mxu0 0.0
  %1293 = vmatprep.subr.mxu0 0.0
  %1294 = vmatpush1.msra.mxu0 0.0
  %1295 = vmatprep.subr.mxu0 0.0
  %1296 = vmatpush1.msra.mxu0 0.0
  %1297 = vmatprep.subr.mxu0 0.0
  %1298 = vmatpush1.msra.mxu0 0.0
  %1299 = vmatprep.subr.mxu0 0.0
  %1300 = vmatpush1.msra.mxu0 0.0
  %1301 = vmatprep.subr.mxu0 0.0
  %1302 = vmatpush1.msra.mxu0 0.0
  %1303 = vmatprep.subr.mxu0 0.0
  %1304 = vmatpush1.msra.mxu0 0.0
  %1305 = vmatprep.subr.mxu0 0.0
  %1306 = vmatpush1.msra.mxu0 0.0
  %1307 = vmatprep.subr.mxu0 0.0
  %1308 = vmatpush1.msra.mxu0 0.0
  %1309 = vmatprep.subr.mxu0 0.0
  %1310 = vmatpush1.msra.mxu0 0.0
  %1311 = vmatprep.subr.mxu0 0.0
  %1312 = vmatpush1.msra.mxu0 0.0
  %1313 = vmatprep.subr.mxu0 0.0
  %1314 = vmatpush1.msra.mxu0 0.0
  %1315 = vmatprep.subr.mxu0 0.0
  %1316 = vmatpush1.msra.mxu0 0.0
  %1317 = vmatprep.subr.mxu0 0.0
  %1318 = vmatpush1.msra.mxu0 0.0
  %1319 = vmatprep.subr.mxu0 0.0
  %1320 = vmatpush1.msra.mxu0 0.0
  %1321 = vmatprep.subr.mxu0 0.0
  %1322 = vmatpush1.msra.mxu0 0.0
  %1323 = vmatprep.subr.mxu0 0.0
  %1324 = vmatpush1.msra.mxu0 0.0
  %1325 = vmatprep.subr.mxu0 0.0
  %1326 = vmatpush1.msra.mxu0 0.0
  %1327 = vmatprep.subr.mxu0 0.0
  %1328 = vmatpush1.msra.mxu0 0.0
  %1329 = vmatprep.subr.mxu0 0.0
  %1330 = vmatpush1.msra.mxu0 0.0
  %1331 = vmatprep.mubr.f32.mxu0 0.0
  %1332 = vmatmul.mubr.f32.gmra.mrb[0].mxu0 %v1265
  %v1333 = vpop.f32.mrb[0].mxu0
  %v1334 = vadd.f32 0.0, %v1333
  %v1335 = vpop.f32.mrb[0].mxu0
  %1336 = vdwg.mxu0
  %v1337 = vld [vmem:[%s7] sm:$0xff]
  %v1338 = vld [vmem:[%s7 + $0x8] sm:$0xff]
  %v1339 = vld [vmem:[%s7 + $0x10] sm:$0xff]
  %v1340 = vld [vmem:[%s7 + $0x18] sm:$0xff]
  %v1341 = vld [vmem:[%s7 + $0x20] sm:$0xff]
  %v1342 = vld [vmem:[%s7 + $0x28] sm:$0xff]
  %v1343 = vld [vmem:[%s7 + $0x30] sm:$0xff]
  %v1344 = vld [vmem:[%s7 + $0x38] sm:$0xff]
  %v1345 = vld [vmem:[%s7 + $0x40] sm:$0xff]
  %v1346 = vld [vmem:[%s7 + $0x48] sm:$0xff]
  %v1347 = vld [vmem:[%s7 + $0x50] sm:$0xff]
  %v1348 = vld [vmem:[%s7 + $0x58] sm:$0xff]
  %v1349 = vld [vmem:[%s7 + $0x60] sm:$0xff]
  %v1350 = vld [vmem:[%s7 + $0x68] sm:$0xff]
  %v1351 = vld [vmem:[%s7 + $0x70] sm:$0xff]
  %v1352 = vld [vmem:[%s7 + $0x78] sm:$0xff]
  %v1353 = vld [vmem:[%s8] sm:$0x1]
  %v1355 = vlaneseq
  %v1356 = vshrl.u32 %v1355, 7
  %v1357 = vsub.s32 0, %v1356
  %v1358 = vrot.slane %v1353, %v1357
  %1360 = vmatprep.subr.mxu0 0.0
  %1361 = vmatpush1.msra.mxu0 %v1337
  %1362 = vmatprep.subr.mxu0 0.0
  %1363 = vmatpush1.msra.mxu0 %v1338
  %1364 = vmatprep.subr.mxu0 0.0
  %1365 = vmatpush1.msra.mxu0 %v1339
  %1366 = vmatprep.subr.mxu0 0.0
  %1367 = vmatpush1.msra.mxu0 %v1340
  %1368 = vmatprep.subr.mxu0 0.0
  %1369 = vmatpush1.msra.mxu0 %v1341
  %1370 = vmatprep.subr.mxu0 0.0
  %1371 = vmatpush1.msra.mxu0 %v1342
  %1372 = vmatprep.subr.mxu0 0.0
  %1373 = vmatpush1.msra.mxu0 %v1343
  %1374 = vmatprep.subr.mxu0 0.0
  %1375 = vmatpush1.msra.mxu0 %v1344
  %1376 = vmatprep.subr.mxu0 0.0
  %1377 = vmatpush1.msra.mxu0 %v1345
  %1378 = vmatprep.subr.mxu0 0.0
  %1379 = vmatpush1.msra.mxu0 %v1346
  %1380 = vmatprep.subr.mxu0 0.0
  %1381 = vmatpush1.msra.mxu0 %v1347
  %1382 = vmatprep.subr.mxu0 0.0
  %1383 = vmatpush1.msra.mxu0 %v1348
  %1384 = vmatprep.subr.mxu0 0.0
  %1385 = vmatpush1.msra.mxu0 %v1349
  %1386 = vmatprep.subr.mxu0 0.0
  %1387 = vmatpush1.msra.mxu0 %v1350
  %1388 = vmatprep.subr.mxu0 0.0
  %1389 = vmatpush1.msra.mxu0 %v1351
  %1390 = vmatprep.subr.mxu0 0.0
  %1391 = vmatpush1.msra.mxu0 %v1352
  %1392 = vmatprep.subr.mxu0 0.0
  %1393 = vmatpush1.msra.mxu0 0.0
  %1394 = vmatprep.subr.mxu0 0.0
  %1395 = vmatpush1.msra.mxu0 0.0
  %1396 = vmatprep.subr.mxu0 0.0
  %1397 = vmatpush1.msra.mxu0 0.0
  %1398 = vmatprep.subr.mxu0 0.0
  %1399 = vmatpush1.msra.mxu0 0.0
  %1400 = vmatprep.subr.mxu0 0.0
  %1401 = vmatpush1.msra.mxu0 0.0
  %1402 = vmatprep.subr.mxu0 0.0
  %1403 = vmatpush1.msra.mxu0 0.0
  %1404 = vmatprep.subr.mxu0 0.0
  %1405 = vmatpush1.msra.mxu0 0.0
  %1406 = vmatprep.subr.mxu0 0.0
  %1407 = vmatpush1.msra.mxu0 0.0
  %1408 = vmatprep.subr.mxu0 0.0
  %1409 = vmatpush1.msra.mxu0 0.0
  %1410 = vmatprep.subr.mxu0 0.0
  %1411 = vmatpush1.msra.mxu0 0.0
  %1412 = vmatprep.subr.mxu0 0.0
  %1413 = vmatpush1.msra.mxu0 0.0
  %1414 = vmatprep.subr.mxu0 0.0
  %1415 = vmatpush1.msra.mxu0 0.0
  %1416 = vmatprep.subr.mxu0 0.0
  %1417 = vmatpush1.msra.mxu0 0.0
  %1418 = vmatprep.subr.mxu0 0.0
  %1419 = vmatpush1.msra.mxu0 0.0
  %1420 = vmatprep.subr.mxu0 0.0
  %1421 = vmatpush1.msra.mxu0 0.0
  %1422 = vmatprep.subr.mxu0 0.0
  %1423 = vmatpush1.msra.mxu0 0.0
  %1424 = vmatprep.mubr.f32.mxu0 0.0
  %1425 = vmatmul.mubr.f32.gmra.mrb[0].mxu0 %v1334
  %v1426 = vpop.f32.mrb[0].mxu0
  %v1427 = vadd.f32 %v1358, %v1426
  %v1428 = vpop.f32.mrb[0].mxu0
  %1429 = vdwg.mxu0
  %v1430 = vmax.f32 %v1427, 0.0
  %v1431 = vld [vmem:[%s9] sm:$0xff]
  %v1432 = vld [vmem:[%s9 + $0x8] sm:$0xff]
  %v1433 = vld [vmem:[%s9 + $0x10] sm:$0xff]
  %v1434 = vld [vmem:[%s9 + $0x18] sm:$0xff]
  %v1435 = vld [vmem:[%s9 + $0x20] sm:$0xff]
  %v1436 = vld [vmem:[%s9 + $0x28] sm:$0xff]
  %v1437 = vld [vmem:[%s9 + $0x30] sm:$0xff]
  %v1438 = vld [vmem:[%s9 + $0x38] sm:$0xff]
  %v1439 = vld [vmem:[%s9 + $0x40] sm:$0xff]
  %v1440 = vld [vmem:[%s9 + $0x48] sm:$0xff]
  %v1441 = vld [vmem:[%s9 + $0x50] sm:$0xff]
  %v1442 = vld [vmem:[%s9 + $0x58] sm:$0xff]
  %v1443 = vld [vmem:[%s9 + $0x60] sm:$0xff]
  %v1444 = vld [vmem:[%s9 + $0x68] sm:$0xff]
  %v1445 = vld [vmem:[%s9 + $0x70] sm:$0xff]
  %v1446 = vld [vmem:[%s9 + $0x78] sm:$0xff]
  %v1447 = vld [vmem:[%s10] sm:$0x1]
  %v1449 = vlaneseq
  %v1450 = vshrl.u32 %v1449, 7
  %v1451 = vsub.s32 0, %v1450
  %v1452 = vrot.slane %v1447, %v1451
  %1454 = vmatprep.subr.mxu0 0.0
  %1455 = vmatpush1.msra.mxu0 %v1431
  %1456 = vmatprep.subr.mxu0 0.0
  %1457 = vmatpush1.msra.mxu0 %v1432
  %1458 = vmatprep.subr.mxu0 0.0
  %1459 = vmatpush1.msra.mxu0 %v1433
  %1460 = vmatprep.subr.mxu0 0.0
  %1461 = vmatpush1.msra.mxu0 %v1434
  %1462 = vmatprep.subr.mxu0 0.0
  %1463 = vmatpush1.msra.mxu0 %v1435
  %1464 = vmatprep.subr.mxu0 0.0
  %1465 = vmatpush1.msra.mxu0 %v1436
  %1466 = vmatprep.subr.mxu0 0.0
  %1467 = vmatpush1.msra.mxu0 %v1437
  %1468 = vmatprep.subr.mxu0 0.0
  %1469 = vmatpush1.msra.mxu0 %v1438
  %1470 = vmatprep.subr.mxu0 0.0
  %1471 = vmatpush1.msra.mxu0 %v1439
  %1472 = vmatprep.subr.mxu0 0.0
  %1473 = vmatpush1.msra.mxu0 %v1440
  %1474 = vmatprep.subr.mxu0 0.0
  %1475 = vmatpush1.msra.mxu0 %v1441
  %1476 = vmatprep.subr.mxu0 0.0
  %1477 = vmatpush1.msra.mxu0 %v1442
  %1478 = vmatprep.subr.mxu0 0.0
  %1479 = vmatpush1.msra.mxu0 %v1443
  %1480 = vmatprep.subr.mxu0 0.0
  %1481 = vmatpush1.msra.mxu0 %v1444
  %1482 = vmatprep.subr.mxu0 0.0
  %1483 = vmatpush1.msra.mxu0 %v1445
  %1484 = vmatprep.subr.mxu0 0.0
  %1485 = vmatpush1.msra.mxu0 %v1446
  %1486 = vmatprep.subr.mxu0 0.0
  %1487 = vmatpush1.msra.mxu0 0.0
  %1488 = vmatprep.subr.mxu0 0.0
  %1489 = vmatpush1.msra.mxu0 0.0
  %1490 = vmatprep.subr.mxu0 0.0
  %1491 = vmatpush1.msra.mxu0 0.0
  %1492 = vmatprep.subr.mxu0 0.0
  %1493 = vmatpush1.msra.mxu0 0.0
  %1494 = vmatprep.subr.mxu0 0.0
  %1495 = vmatpush1.msra.mxu0 0.0
  %1496 = vmatprep.subr.mxu0 0.0
  %1497 = vmatpush1.msra.mxu0 0.0
  %1498 = vmatprep.subr.mxu0 0.0
  %1499 = vmatpush1.msra.mxu0 0.0
  %1500 = vmatprep.subr.mxu0 0.0
  %1501 = vmatpush1.msra.mxu0 0.0
  %1502 = vmatprep.subr.mxu0 0.0
  %1503 = vmatpush1.msra.mxu0 0.0
  %1504 = vmatprep.subr.mxu0 0.0
  %1505 = vmatpush1.msra.mxu0 0.0
  %1506 = vmatprep.subr.mxu0 0.0
  %1507 = vmatpush1.msra.mxu0 0.0
  %1508 = vmatprep.subr.mxu0 0.0
  %1509 = vmatpush1.msra.mxu0 0.0
  %1510 = vmatprep.subr.mxu0 0.0
  %1511 = vmatpush1.msra.mxu0 0.0
  %1512 = vmatprep.subr.mxu0 0.0
  %1513 = vmatpush1.msra.mxu0 0.0
  %1514 = vmatprep.subr.mxu0 0.0
  %1515 = vmatpush1.msra.mxu0 0.0
  %1516 = vmatprep.subr.mxu0 0.0
  %1517 = vmatpush1.msra.mxu0 0.0
  %1518 = vmatprep.mubr.f32.mxu0 0.0
  %1519 = vmatmul.mubr.f32.gmra.mrb[0].mxu0 %v1430
  %v1520 = vpop.f32.mrb[0].mxu0
  %v1521 = vadd.f32 %v1452, %v1520
  %v1522 = vpop.f32.mrb[0].mxu0
  %1523 = vdwg.mxu0
  %v1524 = vmax.f32 %v1521, 0.0
  %v1525 = vld [vmem:[%s11] sm:$0xff]
  %v1526 = vld [vmem:[%s11 + $0x8] sm:$0xff]
  %v1527 = vld [vmem:[%s11 + $0x10] sm:$0xff]
  %v1528 = vld [vmem:[%s11 + $0x18] sm:$0xff]
  %v1529 = vld [vmem:[%s11 + $0x20] sm:$0xff]
  %v1530 = vld [vmem:[%s11 + $0x28] sm:$0xff]
  %v1531 = vld [vmem:[%s11 + $0x30] sm:$0xff]
  %v1532 = vld [vmem:[%s11 + $0x38] sm:$0xff]
  %v1533 = vld [vmem:[%s11 + $0x40] sm:$0xff]
  %v1534 = vld [vmem:[%s11 + $0x48] sm:$0xff]
  %v1535 = vld [vmem:[%s11 + $0x50] sm:$0xff]
  %v1536 = vld [vmem:[%s11 + $0x58] sm:$0xff]
  %v1537 = vld [vmem:[%s11 + $0x60] sm:$0xff]
  %v1538 = vld [vmem:[%s11 + $0x68] sm:$0xff]
  %v1539 = vld [vmem:[%s11 + $0x70] sm:$0xff]
  %v1540 = vld [vmem:[%s11 + $0x78] sm:$0xff]
  %v1541 = vld [vmem:[%s12] sm:$0x1]
  %v1543 = vlaneseq
  %v1544 = vshrl.u32 %v1543, 7
  %v1545 = vsub.s32 0, %v1544
  %v1546 = vrot.slane %v1541, %v1545
  %1548 = vmatprep.subr.mxu0 0.0
  %1549 = vmatpush1.msra.mxu0 %v1525
  %1550 = vmatprep.subr.mxu0 0.0
  %1551 = vmatpush1.msra.mxu0 %v1526
  %1552 = vmatprep.subr.mxu0 0.0
  %1553 = vmatpush1.msra.mxu0 %v1527
  %1554 = vmatprep.subr.mxu0 0.0
  %1555 = vmatpush1.msra.mxu0 %v1528
  %1556 = vmatprep.subr.mxu0 0.0
  %1557 = vmatpush1.msra.mxu0 %v1529
  %1558 = vmatprep.subr.mxu0 0.0
  %1559 = vmatpush1.msra.mxu0 %v1530
  %1560 = vmatprep.subr.mxu0 0.0
  %1561 = vmatpush1.msra.mxu0 %v1531
  %1562 = vmatprep.subr.mxu0 0.0
  %1563 = vmatpush1.msra.mxu0 %v1532
  %1564 = vmatprep.subr.mxu0 0.0
  %1565 = vmatpush1.msra.mxu0 %v1533
  %1566 = vmatprep.subr.mxu0 0.0
  %1567 = vmatpush1.msra.mxu0 %v1534
  %1568 = vmatprep.subr.mxu0 0.0
  %1569 = vmatpush1.msra.mxu0 %v1535
  %1570 = vmatprep.subr.mxu0 0.0
  %1571 = vmatpush1.msra.mxu0 %v1536
  %1572 = vmatprep.subr.mxu0 0.0
  %1573 = vmatpush1.msra.mxu0 %v1537
  %1574 = vmatprep.subr.mxu0 0.0
  %1575 = vmatpush1.msra.mxu0 %v1538
  %1576 = vmatprep.subr.mxu0 0.0
  %1577 = vmatpush1.msra.mxu0 %v1539
  %1578 = vmatprep.subr.mxu0 0.0
  %1579 = vmatpush1.msra.mxu0 %v1540
  %1580 = vmatprep.subr.mxu0 0.0
  %1581 = vmatpush1.msra.mxu0 0.0
  %1582 = vmatprep.subr.mxu0 0.0
  %1583 = vmatpush1.msra.mxu0 0.0
  %1584 = vmatprep.subr.mxu0 0.0
  %1585 = vmatpush1.msra.mxu0 0.0
  %1586 = vmatprep.subr.mxu0 0.0
  %1587 = vmatpush1.msra.mxu0 0.0
  %1588 = vmatprep.subr.mxu0 0.0
  %1589 = vmatpush1.msra.mxu0 0.0
  %1590 = vmatprep.subr.mxu0 0.0
  %1591 = vmatpush1.msra.mxu0 0.0
  %1592 = vmatprep.subr.mxu0 0.0
  %1593 = vmatpush1.msra.mxu0 0.0
  %1594 = vmatprep.subr.mxu0 0.0
  %1595 = vmatpush1.msra.mxu0 0.0
  %1596 = vmatprep.subr.mxu0 0.0
  %1597 = vmatpush1.msra.mxu0 0.0
  %1598 = vmatprep.subr.mxu0 0.0
  %1599 = vmatpush1.msra.mxu0 0.0
  %1600 = vmatprep.subr.mxu0 0.0
  %1601 = vmatpush1.msra.mxu0 0.0
  %1602 = vmatprep.subr.mxu0 0.0
  %1603 = vmatpush1.msra.mxu0 0.0
  %1604 = vmatprep.subr.mxu0 0.0
  %1605 = vmatpush1.msra.mxu0 0.0
  %1606 = vmatprep.subr.mxu0 0.0
  %1607 = vmatpush1.msra.mxu0 0.0
  %1608 = vmatprep.subr.mxu0 0.0
  %1609 = vmatpush1.msra.mxu0 0.0
  %1610 = vmatprep.subr.mxu0 0.0
  %1611 = vmatpush1.msra.mxu0 0.0
  %1612 = vmatprep.mubr.f32.mxu0 0.0
  %1613 = vmatmul.mubr.f32.gmra.mrb[0].mxu0 %v1524
  %v1614 = vpop.f32.mrb[0].mxu0
  %v1615 = vadd.f32 %v1546, %v1614
  %v1616 = vpop.f32.mrb[0].mxu0
  %1617 = vdwg.mxu0
  %1618 = vst [vmem:[%s13] sm:$0xff] %v1615
  // Predicated region
  $region54: #{chebnet_forward.1} parent=0 // pred_check
    _
  $region55: #{chebnet_forward.1} parent=0 // pred_check_branch
    %1620 = sbr.rel (0) target = $region57
  $region56: #{chebnet_forward.1} parent=0 // pred_region
    _
  $region57: #{chebnet_forward.1} parent=0 // pred_fallthru
    _
  // Predicated region
  $region58: #{chebnet_forward.1} parent=0 // pred_check
    _
  $region59: #{chebnet_forward.1} parent=0 // pred_check_branch
    %1622 = sbr.rel (0) target = $region61
  $region60: #{chebnet_forward.1} parent=0 // pred_region
    _
  $region61: #{chebnet_forward.1} parent=0 // pred_fallthru
    _

</llo_original>
